<compile_context>
chip_gen: v5e
topology: v5e:2x2
jax: 0.10.0
libtpu: 0.0.40
codegen_flags: <defaults>
</compile_context>

<pallas_src>
import functools

import jax
import jax.numpy as jnp
import numpy as np
from jax import lax
from jax.experimental import pallas as pl
from jax.experimental.pallas import tpu as pltpu


_ALIGN = 16   # bf16-native sublane multiple; also satisfies the f32 (8) requirement.


def _round_up(a: int, m: int) -> int:
    return (a + m - 1) // m * m


def _cdiv(a: int, b: int) -> int:
    return (a + b - 1) // b


def _choose_tile(n: int, tile_n: int) -> int:
    """Row tile: multiple of 16, never larger than the (16-rounded) row count, and
    split into >=2 grid steps when possible so both TensorCores get work on v7x."""
    t = max(_ALIGN, min(_round_up(tile_n, _ALIGN), _round_up(n, _ALIGN)))
    if _cdiv(n, t) == 1 and n > _ALIGN:
        t = _round_up(_cdiv(n, 2), _ALIGN)
    return t


# ------------- Pass 1 (bn=True): fused matmul + bias + BN partial sums ---------------
def _mm_bias_stats_kernel(x_ref, wt_ref, b_ref, y_ref, stat_ref, *, n_valid, tile, ragged):
    x = x_ref[...]                                                     # (tile, K) bf16
    if ragged:
        # Zero-mask out-of-range rows of the (possibly OOB) last tile BEFORE the matmul
        # so they contribute nothing to the BN statistics (and garbage can't be NaN).
        row = lax.broadcasted_iota(jnp.int32, (tile, 1), 0) + pl.program_id(0) * tile
        x = jnp.where(row < n_valid, x, jnp.zeros_like(x))
    # Single lane-dense MXU matmul, f32 accumulate.
    y_pre = jnp.dot(x, wt_ref[...], preferred_element_type=jnp.float32)  # (tile, C) f32
    y_ref[...] = (y_pre + b_ref[...]).astype(y_ref.dtype)                # bf16 writeback
    # Per-tile column sums of the PRE-bias values (well conditioned for the variance).
    cs = jnp.sum(y_pre, axis=0, keepdims=True)                           # (1, C)
    cq = jnp.sum(y_pre * y_pre, axis=0, keepdims=True)                   # (1, C)
    stat_ref[0] = jnp.concatenate([cs, cq], axis=0)                      # (2, C)


# ------------- Pass 1 (bn=False): fused matmul + bias + ReLU -------------------------
def _mm_bias_relu_kernel(x_ref, wt_ref, b_ref, o_ref):
    y = jnp.dot(x_ref[...], wt_ref[...], preferred_element_type=jnp.float32)
    o_ref[...] = jnp.maximum(y + b_ref[...], 0.0).astype(o_ref.dtype)


# ------------- Pass 2: affine BN (precomputed scale/shift) + ReLU --------------------
def _bn_relu_kernel(y_ref, scale_ref, shift_ref, o_ref):
    y = y_ref[...].astype(jnp.float32)
    o_ref[...] = jnp.maximum(y * scale_ref[...] + shift_ref[...], 0.0)


def ver_hor_bn_re(x, wv, wh, b, gamma, beta, *, bn=True, eps=1e-5, tile_n=1024):
    """x: (B, P, hor_in, ver_in) f32 -> (B, P, hor_out, ver_out) f32."""
    B, P, hor_in, ver_in = x.shape
    ver_out = wv.shape[0]
    hor_out = wh.shape[0]
    N = B * P
    K = hor_in * ver_in
    C = hor_out * ver_out

    # Fold both linear maps into one matrix:  y = Wh @ x @ Wv^T
    #   <=>  y_flat = x_flat @ kron(Wh, Wv)^T     (row-major flattening).
    w = jnp.kron(wh.astype(jnp.float32), wv.astype(jnp.float32))     # (C, K)
    wt = w.T.astype(jnp.bfloat16)                                     # (K, C) bf16 for the MXU
    b_flat = b.astype(jnp.float32).reshape(1, C)

    xf = x.reshape(N, K).astype(jnp.bfloat16)                         # halves the x HBM read

    # Only trivially small inputs (N < 16) take a pad path; the normal ragged last tile
    # is handled fully in-kernel (no jnp.pad / out[:N] HBM copies).
    n_alloc = max(N, _ALIGN)
    if n_alloc != N:
        xf = jnp.pad(xf, ((0, n_alloc - N), (0, 0)))

    tile = _choose_tile(n_alloc, tile_n)
    num_tiles = _cdiv(n_alloc, tile)
    ragged = (num_tiles * tile != N)

    x_spec = pl.BlockSpec((tile, K), lambda i: (i, 0))
    w_spec = pl.BlockSpec((K, C), lambda i: (0, 0))
    b_spec = pl.BlockSpec((1, C), lambda i: (0, 0))
    y_spec = pl.BlockSpec((tile, C), lambda i: (i, 0))

    if not bn:
        out = pl.pallas_call(
            _mm_bias_relu_kernel,
            out_shape=jax.ShapeDtypeStruct((n_alloc, C), jnp.float32),
            grid_spec=pltpu.PrefetchScalarGridSpec(
                num_scalar_prefetch=0, grid=(num_tiles,),
                in_specs=[x_spec, w_spec, b_spec],
                out_specs=y_spec),
            compiler_params=pltpu.CompilerParams(dimension_semantics=("parallel",)),
            cost_estimate=pl.CostEstimate(
                flops=2 * n_alloc * K * C, transcendentals=0,
                bytes_accessed=2 * n_alloc * K + 2 * K * C + 4 * n_alloc * C + 4 * C),
        )(xf, wt, b_flat)
        if n_alloc != N:
            out = out[:N]
        return out.reshape(B, P, hor_out, ver_out)

    # ---------------- Pass 1: matmul + bias (-> bf16 y) + per-tile BN partials -------
    stat_spec = pl.BlockSpec((1, 2, C), lambda i: (i, 0, 0))
    kernel1 = functools.partial(_mm_bias_stats_kernel,
                                n_valid=N, tile=tile, ragged=ragged)
    y, stats = pl.pallas_call(
        kernel1,
        out_shape=(jax.ShapeDtypeStruct((n_alloc, C), jnp.bfloat16),
                   jax.ShapeDtypeStruct((num_tiles, 2, C), jnp.float32)),
        grid_spec=pltpu.PrefetchScalarGridSpec(
            num_scalar_prefetch=0, grid=(num_tiles,),
            in_specs=[x_spec, w_spec, b_spec],
            out_specs=(y_spec, stat_spec)),
        compiler_params=pltpu.CompilerParams(dimension_semantics=("parallel",)),
        cost_estimate=pl.CostEstimate(
            flops=2 * n_alloc * K * C + 3 * n_alloc * C, transcendentals=0,
            bytes_accessed=2 * n_alloc * K + 2 * K * C + 2 * n_alloc * C
                           + 4 * C + 8 * num_tiles * C),
    )(xf, wt, b_flat)

    # ---------------- BatchNorm2d(hor_out) training-mode stats (biased var), tiny ----
    n_f = jnp.float32(N)
    sum_pre = jnp.sum(stats[:, 0, :], axis=0)            # (C,)  sum of (y - b) over rows
    sumsq_pre = jnp.sum(stats[:, 1, :], axis=0)          # (C,)  sum of (y - b)^2
    mu_pre = sum_pre / n_f
    var_col = sumsq_pre / n_f - mu_pre * mu_pre          # per-column Var(y), shift-invariant
    mu_col = (mu_pre + b_flat[0]).reshape(hor_out, ver_out)   # per-column E[y]
    var_col = var_col.reshape(hor_out, ver_out)
    mean_ch = jnp.mean(mu_col, axis=1)                   # (hor_out,)
    # Law of total variance: pooled var = mean(per-column var) + mean(between-column^2)
    var_ch = jnp.mean(var_col + (mu_col - mean_ch[:, None]) ** 2, axis=1)
    var_ch = jnp.maximum(var_ch, 0.0)                    # guard tiny negative rounding
    scale_ch = gamma.astype(jnp.float32) / jnp.sqrt(var_ch + eps)
    shift_ch = beta.astype(jnp.float32) - mean_ch * scale_ch
    scale = jnp.broadcast_to(scale_ch[:, None], (hor_out, ver_out)).reshape(1, C)
    shift = jnp.broadcast_to(shift_ch[:, None], (hor_out, ver_out)).reshape(1, C)

    # ---------------- Pass 2: streaming affine BN + ReLU (its own, larger tile) ------
    tile2 = _choose_tile(n_alloc, 2 * tile_n)
    num_tiles2 = _cdiv(n_alloc, tile2)
    y2_spec = pl.BlockSpec((tile2, C), lambda i: (i, 0))
    out = pl.pallas_call(
        _bn_relu_kernel,
        out_shape=jax.ShapeDtypeStruct((n_alloc, C), jnp.float32),
        grid_spec=pltpu.PrefetchScalarGridSpec(
            num_scalar_prefetch=0, grid=(num_tiles2,),
            in_specs=[y2_spec,
                      pl.BlockSpec((1, C), lambda i: (0, 0)),
                      pl.BlockSpec((1, C), lambda i: (0, 0))],
            out_specs=y2_spec),
        compiler_params=pltpu.CompilerParams(dimension_semantics=("parallel",)),
        cost_estimate=pl.CostEstimate(
            flops=3 * n_alloc * C, transcendentals=0,
            bytes_accessed=2 * n_alloc * C + 4 * n_alloc * C + 8 * C),
    )(y, scale, shift)

    if n_alloc != N:
        out = out[:N]
    return out.reshape(B, P, hor_out, ver_out)


# ---------------- Pure-JAX f32 reference (mirrors the PyTorch forward) ---------------
def ver_hor_bn_re_ref(x, wv, wh, b, gamma, beta, *, bn=True, eps=1e-5):
    y = jnp.einsum('bphi,oi->bpho', x, wv)           # ver Linear
    y = jnp.einsum('kh,bpho->bpko', wh, y)           # hor Linear (on transposed dims)
    y = y + b
    if bn:
        mean = jnp.mean(y, axis=(0, 1, 3), keepdims=True)
        var = jnp.mean((y - mean) ** 2, axis=(0, 1, 3), keepdims=True)   # biased
        y = (y - mean) / jnp.sqrt(var + eps)
        y = y * gamma[None, None, :, None] + beta[None, None, :, None]
    return jnp.maximum(y, 0.0)


if __name__ == "__main__":
    key = jax.random.PRNGKey(0)
    B, P = 2, 9                       # N = 18: exercises the in-kernel ragged-tile mask
    ver_in, ver_out = 32, 24
    hor_in, hor_out = 16, 12

    kx, kv, kh, kb, kg, kbt = jax.random.split(key, 6)
    x = jax.random.normal(kx, (B, P, hor_in, ver_in), dtype=jnp.float32)

    # Deterministic parameter init (shapes from the module's __init__).
    wv = jax.random.normal(kv, (ver_out, ver_in), dtype=jnp.float32) / np.sqrt(ver_in)
    wh = jax.random.normal(kh, (hor_out, hor_in), dtype=jnp.float32) / np.sqrt(hor_in)
    # xavier_normal_ with gain('relu') = sqrt(2)
    b_std = np.sqrt(2.0) * np.sqrt(2.0 / (ver_out + hor_out))
    b = jax.random.normal(kb, (hor_out, ver_out), dtype=jnp.float32) * b_std
    gamma = 1.0 + 0.1 * jax.random.normal(kg, (hor_out,), dtype=jnp.float32)
    beta = 0.1 * jax.random.normal(kbt, (hor_out,), dtype=jnp.float32)

    fwd = jax.jit(ver_hor_bn_re, static_argnames=("bn", "tile_n"))

    # bf16 MXU inputs + bf16 y intermediate -> loosened tolerances vs the f32 reference.
    out = jax.block_until_ready(fwd(x, wv, wh, b, gamma, beta, bn=True))
    ref = ver_hor_bn_re_ref(x, wv, wh, b, gamma, beta, bn=True)
    np.testing.assert_allclose(np.asarray(out), np.asarray(ref), rtol=5e-2, atol=5e-2)

    out2 = jax.block_until_ready(fwd(x, wv, wh, b, gamma, beta, bn=False))
    ref2 = ver_hor_bn_re_ref(x, wv, wh, b, gamma, beta, bn=False)
    np.testing.assert_allclose(np.asarray(out2), np.asarray(ref2), rtol=5e-2, atol=5e-2)

    print("KERNEL_OK")
</pallas_src>

<mosaic_0001>
module attributes {stable_mosaic.version = 11 : i64} {
  func.func @_mm_bias_stats_kernel(%arg0: i32, %arg1: memref<16x512xbf16, #tpu.memory_space<vmem>>, %arg2: memref<512x288xbf16, #tpu.memory_space<vmem>>, %arg3: memref<1x288xf32, #tpu.memory_space<vmem>>, %arg4: memref<16x288xbf16, #tpu.memory_space<vmem>>, %arg5: memref<1x2x288xf32, #tpu.memory_space<vmem>>) attributes {dimension_semantics = [#tpu.dimension_semantics<parallel>], iteration_bounds = array<i64: 2>, scalar_prefetch = 0 : i64, scratch_operands = 0 : i64, tpu.core_type = #tpu.core_type<tc>, window_params = [{transform_indices = @transform_0, window_bounds = array<i64: 16, 512>}, {pipeline_mode = #tpu.pipeline_mode<synchronous>, transform_indices = @transform_1, window_bounds = array<i64: 512, 288>}, {pipeline_mode = #tpu.pipeline_mode<synchronous>, transform_indices = @transform_2, window_bounds = array<i64: 1, 288>}, {transform_indices = @transform_3, window_bounds = array<i64: 16, 288>}, {transform_indices = @transform_4, window_bounds = array<i64: 1, 2, 288>}]} {
    %c0 = arith.constant 0 : index
    %c0_0 = arith.constant 0 : index
    %0 = vector.load %arg1[%c0, %c0_0] : memref<16x512xbf16, #tpu.memory_space<vmem>>, vector<16x512xbf16>
    %1 = tpu.iota {dimensions = array<i32: 0>} : vector<16x1xi32>
    %c16_i32 = arith.constant 16 : i32
    %2 = arith.muli %arg0, %c16_i32 : i32
    %3 = vector.broadcast %2 : i32 to vector<16x1xi32>
    %4 = arith.addi %1, %3 : vector<16x1xi32>
    %c18_i32 = arith.constant 18 : i32
    %5 = vector.broadcast %c18_i32 : i32 to vector<16x1xi32>
    %6 = arith.cmpi slt, %4, %5 : vector<16x1xi32>
    %cst = arith.constant 0.000000e+00 : bf16
    %7 = vector.broadcast %cst : bf16 to vector<16x512xbf16>
    %8 = vector.shape_cast %6 : vector<16x1xi1> to vector<16x1xi1>
    %9 = vector.broadcast %8 : vector<16x1xi1> to vector<16x512xi1>
    %10 = arith.select %9, %0, %7 : vector<16x512xi1>, vector<16x512xbf16>
    %c0_1 = arith.constant 0 : index
    %c0_2 = arith.constant 0 : index
    %11 = vector.load %arg2[%c0_1, %c0_2] : memref<512x288xbf16, #tpu.memory_space<vmem>>, vector<512x288xbf16>
    %cst_3 = arith.constant dense<0.000000e+00> : vector<16x288xf32>
    %12 = tpu.matmul %10, %11, %cst_3 {dimension_numbers = #tpu.dot_dimension_numbers<[1], [0], [0], [1], [0, 0, 1, 1], [], []>} : vector<16x512xbf16>, vector<512x288xbf16>, vector<16x288xf32> -> vector<16x288xf32>
    %c0_4 = arith.constant 0 : index
    %c0_5 = arith.constant 0 : index
    %13 = vector.load %arg3[%c0_4, %c0_5] : memref<1x288xf32, #tpu.memory_space<vmem>>, vector<1x288xf32>
    %14 = vector.broadcast %13 : vector<1x288xf32> to vector<16x288xf32>
    %15 = arith.addf %12, %14 : vector<16x288xf32>
    %16 = arith.truncf %15 : vector<16x288xf32> to vector<16x288xbf16>
    %c0_6 = arith.constant 0 : index
    %c0_7 = arith.constant 0 : index
    %17 = vector.load %arg4[%c0_6, %c0_7] : memref<16x288xbf16, #tpu.memory_space<vmem>>, vector<16x288xbf16>
    tpu.vector_store %arg4[%c0_6, %c0_7], %16 {strides = array<i32>} : memref<16x288xbf16, #tpu.memory_space<vmem>>, vector<16x288xbf16>,
    %cst_8 = arith.constant dense<0.000000e+00> : vector<288xf32>
    %18 = vector.multi_reduction <add>, %12, %cst_8 [0] : vector<16x288xf32> to vector<288xf32>
    %19 = vector.shape_cast %18 : vector<288xf32> to vector<1x288xf32>
    %20 = arith.mulf %12, %12 : vector<16x288xf32>
    %cst_9 = arith.constant dense<0.000000e+00> : vector<288xf32>
    %21 = vector.multi_reduction <add>, %20, %cst_9 [0] : vector<16x288xf32> to vector<288xf32>
    %22 = vector.shape_cast %21 : vector<288xf32> to vector<1x288xf32>
    %23 = tpu.concatenate %19, %22 in 0 : vector<1x288xf32>, vector<1x288xf32> -> vector<2x288xf32>
    %c0_10 = arith.constant 0 : index
    %c0_11 = arith.constant 0 : index
    %c0_12 = arith.constant 0 : index
    %24 = vector.load %arg5[%c0_10, %c0_11, %c0_12] : memref<1x2x288xf32, #tpu.memory_space<vmem>>, vector<1x2x288xf32>
    %25 = vector.shape_cast %24 : vector<1x2x288xf32> to vector<2x288xf32>
    %26 = vector.shape_cast %23 : vector<2x288xf32> to vector<1x2x288xf32>
    tpu.vector_store %arg5[%c0_10, %c0_11, %c0_12], %26 {strides = array<i32>} : memref<1x2x288xf32, #tpu.memory_space<vmem>>, vector<1x2x288xf32>,
    return
  }
  func.func @transform_0(%arg0: i32) -> (i32, i32) {
    %c0_i32 = arith.constant 0 : i32
    %c0_i32_0 = arith.constant 0 : i32
    return %arg0, %c0_i32 : i32, i32
  }
  func.func @transform_1(%arg0: i32) -> (i32, i32) {
    %c0_i32 = arith.constant 0 : i32
    %c0_i32_0 = arith.constant 0 : i32
    %c0_i32_1 = arith.constant 0 : i32
    return %c0_i32, %c0_i32_0 : i32, i32
  }
  func.func @transform_2(%arg0: i32) -> (i32, i32) {
    %c0_i32 = arith.constant 0 : i32
    %c0_i32_0 = arith.constant 0 : i32
    %c0_i32_1 = arith.constant 0 : i32
    return %c0_i32, %c0_i32_0 : i32, i32
  }
  func.func @transform_3(%arg0: i32) -> (i32, i32) {
    %c0_i32 = arith.constant 0 : i32
    %c0_i32_0 = arith.constant 0 : i32
    return %arg0, %c0_i32 : i32, i32
  }
  func.func @transform_4(%arg0: i32) -> (i32, i32, i32) {
    %c0_i32 = arith.constant 0 : i32
    %c0_i32_0 = arith.constant 0 : i32
    %c0_i32_1 = arith.constant 0 : i32
    return %arg0, %c0_i32, %c0_i32_0 : i32, i32, i32
  }
}

module attributes {stable_mosaic.version = 11 : i64} {
  func.func @_bn_relu_kernel(%arg0: i32, %arg1: memref<16x288xbf16, #tpu.memory_space<vmem>>, %arg2: memref<1x288xf32, #tpu.memory_space<vmem>>, %arg3: memref<1x288xf32, #tpu.memory_space<vmem>>, %arg4: memref<16x288xf32, #tpu.memory_space<vmem>>) attributes {dimension_semantics = [#tpu.dimension_semantics<parallel>], iteration_bounds = array<i64: 2>, scalar_prefetch = 0 : i64, scratch_operands = 0 : i64, tpu.core_type = #tpu.core_type<tc>, window_params = [{transform_indices = @transform_0, window_bounds = array<i64: 16, 288>}, {pipeline_mode = #tpu.pipeline_mode<synchronous>, transform_indices = @transform_1, window_bounds = array<i64: 1, 288>}, {pipeline_mode = #tpu.pipeline_mode<synchronous>, transform_indices = @transform_2, window_bounds = array<i64: 1, 288>}, {transform_indices = @transform_3, window_bounds = array<i64: 16, 288>}]} {
    %c0 = arith.constant 0 : index
    %c0_0 = arith.constant 0 : index
    %0 = vector.load %arg1[%c0, %c0_0] : memref<16x288xbf16, #tpu.memory_space<vmem>>, vector<16x288xbf16>
    %1 = arith.extf %0 : vector<16x288xbf16> to vector<16x288xf32>
    %c0_1 = arith.constant 0 : index
    %c0_2 = arith.constant 0 : index
    %2 = vector.load %arg2[%c0_1, %c0_2] : memref<1x288xf32, #tpu.memory_space<vmem>>, vector<1x288xf32>
    %3 = vector.broadcast %2 : vector<1x288xf32> to vector<16x288xf32>
    %4 = arith.mulf %1, %3 : vector<16x288xf32>
    %c0_3 = arith.constant 0 : index
    %c0_4 = arith.constant 0 : index
    %5 = vector.load %arg3[%c0_3, %c0_4] : memref<1x288xf32, #tpu.memory_space<vmem>>, vector<1x288xf32>
    %6 = vector.broadcast %5 : vector<1x288xf32> to vector<16x288xf32>
    %7 = arith.addf %4, %6 : vector<16x288xf32>
    %cst = arith.constant 0.000000e+00 : f32
    %8 = vector.broadcast %cst : f32 to vector<16x288xf32>
    %9 = arith.maximumf %7, %8 : vector<16x288xf32>
    %c0_5 = arith.constant 0 : index
    %c0_6 = arith.constant 0 : index
    %10 = vector.load %arg4[%c0_5, %c0_6] : memref<16x288xf32, #tpu.memory_space<vmem>>, vector<16x288xf32>
    tpu.vector_store %arg4[%c0_5, %c0_6], %9 {strides = array<i32>} : memref<16x288xf32, #tpu.memory_space<vmem>>, vector<16x288xf32>,
    return
  }
  func.func @transform_0(%arg0: i32) -> (i32, i32) {
    %c0_i32 = arith.constant 0 : i32
    %c0_i32_0 = arith.constant 0 : i32
    return %arg0, %c0_i32 : i32, i32
  }
  func.func @transform_1(%arg0: i32) -> (i32, i32) {
    %c0_i32 = arith.constant 0 : i32
    %c0_i32_0 = arith.constant 0 : i32
    %c0_i32_1 = arith.constant 0 : i32
    return %c0_i32, %c0_i32_0 : i32, i32
  }
  func.func @transform_2(%arg0: i32) -> (i32, i32) {
    %c0_i32 = arith.constant 0 : i32
    %c0_i32_0 = arith.constant 0 : i32
    %c0_i32_1 = arith.constant 0 : i32
    return %c0_i32, %c0_i32_0 : i32, i32
  }
  func.func @transform_3(%arg0: i32) -> (i32, i32) {
    %c0_i32 = arith.constant 0 : i32
    %c0_i32_0 = arith.constant 0 : i32
    return %arg0, %c0_i32 : i32, i32
  }
}

</mosaic_0001>

<llo_original>
// kernel: ver_hor_bn_re.3
$region0: #{ver_hor_bn_re.3}
  #allocation0 [shape = 'u32[]', space=smem, size = 0x4, offset = 0x4, fixed_abs, tag = 'smem constant byte address 0x4 - core index']
  #allocation1 [shape = 'u32[72,128]{1,0:T(1,128)}', space=vmem, size = 0x9000, scoped, tag = 'internal scratch']
  %s0 = inlined_call_operand.vmem [shape: bf16[18,288], index: 0, kind: input, shape index: {}]
  %s1 = inlined_call_operand.vmem [shape: f32[1,288], index: 1, kind: input, shape index: {}]
  %s2 = inlined_call_operand.vmem [shape: f32[1,288], index: 2, kind: input, shape index: {}]
  %s3 = inlined_call_operand.vmem [shape: f32[18,288], index: 3, kind: output, shape index: {}]
  %s4 = sld [smem:[#allocation0]]
  $region71: #{ver_hor_bn_re.3} parent=0
    _
  %s6 = ssub.s32 1, %s4
  %s7 = scalar_select 0, %s6, %s4
  $region1: #{ver_hor_bn_re.3} parent=0
    #allocation2 [shape = 'u8[49152]{0}', space=vmem, size = 0xc000, scoped, tag = 'output window, operand 0']
    loop: start=0, step=1, limit=4
    $region2: #{ver_hor_bn_re.3} parent=1 // loop_pre_header
      _
    $region3: #{ver_hor_bn_re.3} parent=1 // loop_header
      %s9 = sphi 0, %s13
      %p10 = scmp.ge.s32.totalorder %s9, 4
      %s19 = sphi 0, %s21
      %s22 = sphi 0, %s19
      %s23 = sphi 0, %s22
      %s39 = sphi 0, %s23
      %s43 = sphi 0, %s43
      %s45 = sphi 0, %s43
      %s46 = sphi 0, %s45
      %s60 = sphi 0, %s46
      %s64 = sphi 0, %s64
      %s66 = sphi 0, %s64
      %s67 = sphi 0, %s66
      %s81 = sphi 0, %s67
      %s87 = sphi 0, %s89
      %s90 = sphi 0, %s87
      %s91 = sphi 0, %s90
      %s107 = sphi 0, %s91
    $region4: #{ver_hor_bn_re.3} parent=1 // loop_header_branch
      %12 = sbr.rel (%p10) target = $region8
    $region5: #{ver_hor_bn_re.3} parent=1 // loop_body
      %s14 = ssub.s32 %s9, 1
      %s15 = ssub.s32 %s9, 2
      %s16 = sadd.s32 %s9, 1
      %s17 = ssub.s32 %s9, %s16
      %p18 = scmp.eq.s32.totalorder %s17, 0
      %s20 = sadd.s32 %s19, 1
      %s21 = scalar_select %p18, %s19, %s20
      %p24 = pneg %p18
      %p25 = scmp.eq.s32.totalorder %s9, 1
      %p26 = por %p24, %p25
      %p27 = scmp.ne.s32.totalorder %s19, %s22
      %p28 = scmp.eq.s32.totalorder %s9, 0
      %p29 = por %p27, %p28
      %p30 = scmp.ne.s32.totalorder %s19, %s22
      %p31 = scmp.eq.s32.totalorder %s14, 1
      %p32 = por %p30, %p31
      %p33 = scmp.ne.s32.totalorder %s22, %s23
      %p34 = scmp.eq.s32.totalorder %s14, 0
      %p35 = por %p33, %p34
      %p36 = scmp.ne.s32.totalorder %s22, %s23
      %p37 = scmp.eq.s32.totalorder %s15, 1
      %p38 = por %p36, %p37
      %p40 = scmp.ne.s32.totalorder %s23, %s39
      %p41 = scmp.eq.s32.totalorder %s15, 0
      %p42 = por %p40, %p41
      %s44 = sadd.s32 %s43, 1
      %p47 = scmp.eq.s32.totalorder %s9, 1
      %p48 = scmp.ne.s32.totalorder %s43, %s45
      %p49 = scmp.eq.s32.totalorder %s9, 0
      %p50 = por %p48, %p49
      %p51 = scmp.ne.s32.totalorder %s43, %s45
      %p52 = scmp.eq.s32.totalorder %s14, 1
      %p53 = por %p51, %p52
      %p54 = scmp.ne.s32.totalorder %s45, %s46
      %p55 = scmp.eq.s32.totalorder %s14, 0
      %p56 = por %p54, %p55
      %p57 = scmp.ne.s32.totalorder %s45, %s46
      %p58 = scmp.eq.s32.totalorder %s15, 1
      %p59 = por %p57, %p58
      %p61 = scmp.ne.s32.totalorder %s46, %s60
      %p62 = scmp.eq.s32.totalorder %s15, 0
      %p63 = por %p61, %p62
      %s65 = sadd.s32 %s64, 1
      %p68 = scmp.eq.s32.totalorder %s9, 1
      %p69 = scmp.ne.s32.totalorder %s64, %s66
      %p70 = scmp.eq.s32.totalorder %s9, 0
      %p71 = por %p69, %p70
      %p72 = scmp.ne.s32.totalorder %s64, %s66
      %p73 = scmp.eq.s32.totalorder %s14, 1
      %p74 = por %p72, %p73
      %p75 = scmp.ne.s32.totalorder %s66, %s67
      %p76 = scmp.eq.s32.totalorder %s14, 0
      %p77 = por %p75, %p76
      %p78 = scmp.ne.s32.totalorder %s66, %s67
      %p79 = scmp.eq.s32.totalorder %s15, 1
      %p80 = por %p78, %p79
      %p82 = scmp.ne.s32.totalorder %s67, %s81
      %p83 = scmp.eq.s32.totalorder %s15, 0
      %p84 = por %p82, %p83
      %s85 = ssub.s32 %s9, %s16
      %p86 = scmp.eq.s32.totalorder %s85, 0
      %s88 = sadd.s32 %s87, 1
      %s89 = scalar_select %p86, %s87, %s88
      %p92 = pneg %p86
      %p93 = scmp.eq.s32.totalorder %s9, 1
      %p94 = por %p92, %p93
      %p95 = scmp.ne.s32.totalorder %s87, %s90
      %p96 = scmp.eq.s32.totalorder %s9, 0
      %p97 = por %p95, %p96
      %p98 = scmp.ne.s32.totalorder %s87, %s90
      %p99 = scmp.eq.s32.totalorder %s14, 1
      %p100 = por %p98, %p99
      %p101 = scmp.ne.s32.totalorder %s90, %s91
      %p102 = scmp.eq.s32.totalorder %s14, 0
      %p103 = por %p101, %p102
      %p104 = scmp.ne.s32.totalorder %s90, %s91
      %p105 = scmp.eq.s32.totalorder %s15, 1
      %p106 = por %p104, %p105
      %p108 = scmp.ne.s32.totalorder %s91, %s107
      %p109 = scmp.eq.s32.totalorder %s15, 0
      %p110 = por %p108, %p109
      %p111 = scmp.le.s32.totalorder 1, %s9
      %p112 = scmp.lt.s32.totalorder %s9, 3
      %p113 = pnand %p111, %p112
      %p114 = pneg %p113
      // Predicated region
      $region9: #{ver_hor_bn_re.3} parent=5 // pred_check
        _
      $region10: #{ver_hor_bn_re.3} parent=5 // pred_check_branch
        %116 = sbr.rel (%p113) target = $region12
      $region11: #{ver_hor_bn_re.3} parent=5 // pred_region
        %s117 = ssub.s32 %s9, 1
        // Predicated region
        $region13: #{ver_hor_bn_re.3} parent=11 // pred_check
          %p118 = pneg %p56
        $region14: #{ver_hor_bn_re.3} parent=11 // pred_check_branch
          %120 = sbr.rel (%p118) target = $region16
        $region15: #{ver_hor_bn_re.3} parent=11 // pred_region
          _
        $region16: #{ver_hor_bn_re.3} parent=11 // pred_fallthru
          _
        // Predicated region
        $region17: #{ver_hor_bn_re.3} parent=11 // pred_check
          %p121 = pneg %p77
        $region18: #{ver_hor_bn_re.3} parent=11 // pred_check_branch
          %123 = sbr.rel (%p121) target = $region20
        $region19: #{ver_hor_bn_re.3} parent=11 // pred_region
          _
        $region20: #{ver_hor_bn_re.3} parent=11 // pred_fallthru
          _
      $region12: #{ver_hor_bn_re.3} parent=5 // pred_fallthru
        _
      %p124 = scmp.lt.s32.totalorder %s9, 2
      // Predicated region
      $region21: #{ver_hor_bn_re.3} parent=5 // pred_check
        %p125 = pneg %p124
      $region22: #{ver_hor_bn_re.3} parent=5 // pred_check_branch
        %127 = sbr.rel (%p125) target = $region24
      $region23: #{ver_hor_bn_re.3} parent=5 // pred_region
        // Predicated region
        $region25: #{ver_hor_bn_re.3} parent=23 // pred_check
          %p128 = pneg %p29
        $region26: #{ver_hor_bn_re.3} parent=23 // pred_check_branch
          %130 = sbr.rel (%p128) target = $region28
        $region27: #{ver_hor_bn_re.3} parent=23 // pred_region
          %s131 = smul.u32 2, %s9
          %s132 = ssub.s32 3, %s131
          %p133 = scmp.lt.s32.totalorder %s132, 2
          %s134 = scalar_select %p133, %s132, 2
          %s135 = smul.u32 4, %s134
          %s136 = smul.u32 %s135, 3
          %p137 = scmp.lt.s32.totalorder %s131, 2
          %s138 = scalar_select %p137, %s131, 2
          %s139 = smul.addr %s138, 3
          %s140 = smul.addr %s139, 4
          %s141 = scalar_lea.vmem %s0, %s140
          %s142 = smul.u32 2, %s9
          %s143 = ssub.s32 3, %s142
          %p144 = scmp.lt.s32.totalorder %s143, 2
          %s145 = scalar_select %p144, %s143, 2
          %s146 = smul.u32 4, %s145
          %s147 = smul.u32 %s146, 3
        $region28: #{ver_hor_bn_re.3} parent=23 // pred_fallthru
          _
      $region24: #{ver_hor_bn_re.3} parent=5 // pred_fallthru
        _
      %p148 = scmp.le.s32.totalorder 1, %s9
      %p149 = scmp.lt.s32.totalorder %s9, 3
      %p150 = pnand %p148, %p149
      %p151 = pneg %p150
      // Predicated region
      $region29: #{ver_hor_bn_re.3} parent=5 // pred_check
        _
      $region30: #{ver_hor_bn_re.3} parent=5 // pred_check_branch
        %153 = sbr.rel (%p150) target = $region32
      $region31: #{ver_hor_bn_re.3} parent=5 // pred_region
        %s154 = ssub.s32 %s9, 1
        %s155 = smul.u32 2, %s14
        %s156 = ssub.s32 3, %s155
        %p157 = scmp.lt.s32.totalorder %s156, 2
        %s158 = scalar_select %p157, %s156, 2
        %s159 = smul.u32 4, %s158
        %s160 = smul.u32 %s159, 3
        %p161 = scmp.lt.s32.totalorder %s155, 2
        %s162 = scalar_select %p161, %s155, 2
        %s163 = smul.addr %s162, 3
        %s164 = smul.addr %s163, 4
        %s165 = scalar_lea.vmem %s0, %s164
        %p166 = pneg %p35
        %p167 = pneg %p32
        %p168 = pneg %p56
        %p169 = pneg %p53
        %p170 = pneg %p77
        %p171 = pneg %p74
        %p172 = pneg %p103
        %p173 = pneg %p100
        %s174 = sand.u32 %s90, 1
        %s175 = sand.u32 %s90, 1
        %s176 = smul.addr %s175, 48
        %s177 = scalar_lea.vmem [#allocation2], %s176
        %s178 = smul.u32 2, %s14
        %s179 = ssub.s32 3, %s178
        %p180 = scmp.lt.s32.totalorder %s179, 2
        %s181 = scalar_select %p180, %s179, 2
        %s182 = smul.u32 4, %s181
        %s183 = smul.u32 %s182, 3
        %p184 = scmp.lt.s32.totalorder %s178, 2
        %s185 = scalar_select %p184, %s178, 2
        %s186 = smul.addr %s185, 3
        %s187 = smul.addr %s186, 4
        %s188 = scalar_lea.vmem %s0, %s187
        %s189 = smul.u32 2, %s14
        %s190 = ssub.s32 3, %s189
        %p191 = scmp.lt.s32.totalorder %s190, 2
        %s192 = scalar_select %p191, %s190, 2
        %s193 = smul.u32 4, %s192
        %s194 = smul.u32 %s193, 3
        %s195 = smul.u32 2, %s14
        %s196 = ssub.s32 3, %s195
        %p197 = scmp.lt.s32.totalorder %s196, 2
        %s198 = scalar_select %p197, %s196, 2
        %s199 = smul.u32 8, %s198
        %s200 = smul.u32 %s199, 3
        %v201 = vld [vmem:[%s188] sm:$0xff]
        %v202 = vld [vmem:[%s188 + $0x8] sm:$0xf]
        %v203 = vld [vmem:[%s188 + $0xc] sm:$0xff]
        %v204 = vld [vmem:[%s188 + $0x14] sm:$0xf]
        %v205 = vunpack.c.l.bf16 %v201
        %v206 = vunpack.c.h.bf16 %v201
        %v207 = vunpack.c.l.bf16 %v202
        %v208 = vunpack.c.l.bf16 %v203
        %v209 = vunpack.c.h.bf16 %v203
        %v210 = vunpack.c.l.bf16 %v204
        %v211 = vld [vmem:[%s1] sm:$0x7]
        %v213 = vperm.slane %v211, 0
        %v214 = vperm.slane %v211, 1
        %v215 = vperm.slane %v211, 2
        %v219 = vmul.f32 %v205, %v213
        %v220 = vmul.f32 %v206, %v214
        %v221 = vmul.f32 %v207, %v215
        %v222 = vmul.f32 %v208, %v213
        %v223 = vmul.f32 %v209, %v214
        %v224 = vmul.f32 %v210, %v215
        %v225 = vld [vmem:[%s2] sm:$0x7]
        %v227 = vperm.slane %v225, 0
        %v228 = vperm.slane %v225, 1
        %v229 = vperm.slane %v225, 2
        %v233 = vadd.f32 %v219, %v227
        %v234 = vadd.f32 %v220, %v228
        %v235 = vadd.f32 %v221, %v229
        %v236 = vadd.f32 %v222, %v227
        %v237 = vadd.f32 %v223, %v228
        %v238 = vadd.f32 %v224, %v229
        %v239 = vmax.f32 %v233, 0.0
        %v240 = vmax.f32 %v234, 0.0
        %v241 = vmax.f32 %v235, 0.0
        %v242 = vmax.f32 %v236, 0.0
        %v243 = vmax.f32 %v237, 0.0
        %v244 = vmax.f32 %v238, 0.0
        %245 = vst [vmem:[%s177] sm:$0xff] %v239
        %246 = vst [vmem:[%s177 + $0x8] sm:$0xff] %v240
        %vm247 = vcmask 261120
        %248 = vst.msk [vmem:[%s177 + $0x10] sm:$0xff] %vm247, %v241
        %249 = vst [vmem:[%s177 + $0x18] sm:$0xff] %v242
        %250 = vst [vmem:[%s177 + $0x20] sm:$0xff] %v243
        %251 = vst.msk [vmem:[%s177 + $0x28] sm:$0xff] %vm247, %v244
        %s252 = sand.u32 %s90, 1
        %s253 = sand.u32 %s90, 1
        %s254 = smul.addr %s253, 48
        %s255 = scalar_lea.vmem [#allocation2], %s254
        // Predicated region
        $region33: #{ver_hor_bn_re.3} parent=31 // pred_check
          %p256 = pneg %p100
        $region34: #{ver_hor_bn_re.3} parent=31 // pred_check_branch
          %258 = sbr.rel (%p256) target = $region36
        $region35: #{ver_hor_bn_re.3} parent=31 // pred_region
          %s259 = smul.u32 2, %s14
          %s260 = ssub.s32 3, %s259
          %p261 = scmp.lt.s32.totalorder %s260, 2
          %s262 = scalar_select %p261, %s260, 2
          %s263 = smul.u32 8, %s262
          %s264 = smul.u32 %s263, 3
          %p265 = scmp.ne.s32.totalorder 0, %s264
          %s266 = smul.addr %s259, 3
          %s267 = smul.addr %s266, 8
          %s268 = scalar_lea.vmem %s3, %s267
          // Predicated region
          $region37: #{ver_hor_bn_re.3} parent=35 // pred_check
            %p269 = pneg %p265
          $region38: #{ver_hor_bn_re.3} parent=35 // pred_check_branch
            %271 = sbr.rel (%p269) target = $region40
          $region39: #{ver_hor_bn_re.3} parent=35 // pred_region
            // Predicated region
            $region41: #{ver_hor_bn_re.3} parent=39 // pred_check
              _
            $region42: #{ver_hor_bn_re.3} parent=39 // pred_check_branch
              %273 = sbr.rel (0) target = $region44
            $region43: #{ver_hor_bn_re.3} parent=39 // pred_region
              %s274 = sshrl.u32 %s262, 1
              // While loop
              $region45: #{ver_hor_bn_re.3} parent=43 // loop_pre_header
                _
              $region46: #{ver_hor_bn_re.3} parent=43 // loop_header
                %s276 = sphi 0, %s278
                %p277 = scmp.ge.s32.totalorder %s276, %s274
                %s281 = sphi 0, %s298
                %s282 = sphi %s255, %s301
                %s283 = sphi %s268, %s302
              $region47: #{ver_hor_bn_re.3} parent=43 // loop_header_branch
                %280 = sbr.rel (%p277) target = $region51
              $region48: #{ver_hor_bn_re.3} parent=43 // loop_body
                %v284 = vld [vmem:[%s282] sm:$0xff]
                %285 = vst [vmem:[%s283] sm:$0xff] %v284
                %v286 = vld [vmem:[%s282 + $0x18] sm:$0xff]
                %287 = vst [vmem:[%s283 + $0x18] sm:$0xff] %v286
                %v288 = vld [vmem:[%s282 + $0x8] sm:$0xff]
                %289 = vst [vmem:[%s283 + $0x8] sm:$0xff] %v288
                %v290 = vld [vmem:[%s282 + $0x20] sm:$0xff]
                %291 = vst [vmem:[%s283 + $0x20] sm:$0xff] %v290
                %v292 = vld [vmem:[%s282 + $0x10] sm:$0xff]
                %293 = vst [vmem:[%s283 + $0x10] sm:$0xff] %v292
                %v294 = vld [vmem:[%s282 + $0x28] sm:$0xff]
                %295 = vst [vmem:[%s283 + $0x28] sm:$0xff] %v294
                %s296 = sadd.s32 1, %s281
                %p297 = scmp.ge.s32.totalorder %s296, %s274
                %s298 = scalar_select %p297, 0, %s296
                %s299 = smul.u32 %s298, 48
                %s300 = smul.u32 %s298, 48
                %s301 = scalar_lea.vmem %s255, %s299 [#allocation2]
                %s302 = scalar_lea.vmem %s268, %s300
              $region49: #{ver_hor_bn_re.3} parent=43 // loop_footer
                %s278 = sadd.s32 %s276, 1
              $region50: #{ver_hor_bn_re.3} parent=43 // loop_footer_branch
                %275 = sbr.rel target = $region46
              $region51: #{ver_hor_bn_re.3} parent=43 // loop_exit
                _
              %s303 = sshrl.u32 %s262, 1
              %s304 = sand.u32 %s262, 1
              %s305 = smul.u32 %s303, 2
              %s306 = smul.u32 24, %s305
              %s307 = scalar_lea.vmem %s255, %s306 [#allocation2]
              %s308 = smul.u32 24, %s305
              %s309 = scalar_lea.vmem %s268, %s308
              // While loop
              $region52: #{ver_hor_bn_re.3} parent=43 // loop_pre_header
                _
              $region53: #{ver_hor_bn_re.3} parent=43 // loop_header
                %s311 = sphi 0, %s313
                %p312 = scmp.ge.s32.totalorder %s311, %s304
                %s316 = sphi 0, %s327
                %s317 = sphi %s307, %s330
                %s318 = sphi %s309, %s331
              $region54: #{ver_hor_bn_re.3} parent=43 // loop_header_branch
                %315 = sbr.rel (%p312) target = $region58
              $region55: #{ver_hor_bn_re.3} parent=43 // loop_body
                %v319 = vld [vmem:[%s317] sm:$0xff]
                %320 = vst [vmem:[%s318] sm:$0xff] %v319
                %v321 = vld [vmem:[%s317 + $0x8] sm:$0xff]
                %322 = vst [vmem:[%s318 + $0x8] sm:$0xff] %v321
                %v323 = vld [vmem:[%s317 + $0x10] sm:$0xff]
                %324 = vst [vmem:[%s318 + $0x10] sm:$0xff] %v323
                %s325 = sadd.s32 1, %s316
                %p326 = scmp.ge.s32.totalorder %s325, %s304
                %s327 = scalar_select %p326, 0, %s325
                %s328 = smul.u32 %s327, 24
                %s329 = smul.u32 %s327, 24
                %s330 = scalar_lea.vmem %s307, %s328 [#allocation2]
                %s331 = scalar_lea.vmem %s309, %s329
              $region56: #{ver_hor_bn_re.3} parent=43 // loop_footer
                %s313 = sadd.s32 %s311, 1
              $region57: #{ver_hor_bn_re.3} parent=43 // loop_footer_branch
                %310 = sbr.rel target = $region53
              $region58: #{ver_hor_bn_re.3} parent=43 // loop_exit
                _
            $region44: #{ver_hor_bn_re.3} parent=39 // pred_fallthru
              _
            // Predicated region
            $region59: #{ver_hor_bn_re.3} parent=39 // pred_check
              _
            $region60: #{ver_hor_bn_re.3} parent=39 // pred_check_branch
              %333 = sbr.rel target = $region62
            $region61: #{ver_hor_bn_re.3} parent=39 // pred_region
              _
            $region62: #{ver_hor_bn_re.3} parent=39 // pred_fallthru
              _
          $region40: #{ver_hor_bn_re.3} parent=35 // pred_fallthru
            _
          %334 = vnop
        $region36: #{ver_hor_bn_re.3} parent=31 // pred_fallthru
          _
      $region32: #{ver_hor_bn_re.3} parent=5 // pred_fallthru
        _
      %p335 = scmp.le.s32.totalorder 2, %s9
      // Predicated region
      $region63: #{ver_hor_bn_re.3} parent=5 // pred_check
        %p336 = pneg %p335
      $region64: #{ver_hor_bn_re.3} parent=5 // pred_check_branch
        %338 = sbr.rel (%p336) target = $region66
      $region65: #{ver_hor_bn_re.3} parent=5 // pred_region
        %s339 = ssub.s32 %s9, 2
        // Predicated region
        $region67: #{ver_hor_bn_re.3} parent=65 // pred_check
          %p340 = pneg %p106
        $region68: #{ver_hor_bn_re.3} parent=65 // pred_check_branch
          %342 = sbr.rel (%p340) target = $region70
        $region69: #{ver_hor_bn_re.3} parent=65 // pred_region
          %s343 = sand.u32 %s91, 1
          %s344 = sand.u32 %s91, 1
          %s345 = smul.addr %s344, 48
          %s346 = scalar_lea.vmem [#allocation2], %s345
        $region70: #{ver_hor_bn_re.3} parent=65 // pred_fallthru
          _
      $region66: #{ver_hor_bn_re.3} parent=5 // pred_fallthru
        _
    $region6: #{ver_hor_bn_re.3} parent=1 // loop_footer
      %s13 = sadd.s32 1, %s9
    $region7: #{ver_hor_bn_re.3} parent=1 // loop_footer_branch
      %8 = sbr.rel target = $region3
    $region8: #{ver_hor_bn_re.3} parent=1 // loop_exit
      _

// kernel: ver_hor_bn_re.2
$region0: #{ver_hor_bn_re.2}
  #allocation0 [shape = 'u32[]', space=smem, size = 0x4, offset = 0x4, fixed_abs, tag = 'smem constant byte address 0x4 - core index']
  #allocation1 [shape = 'u32[72,128]{1,0:T(1,128)}', space=vmem, size = 0x9000, scoped, tag = 'internal scratch']
  %s0 = inlined_call_operand.vmem [shape: bf16[18,512], index: 0, kind: input, shape index: {}]
  %s1 = inlined_call_operand.vmem [shape: bf16[512,288], index: 1, kind: input, shape index: {}]
  %s2 = inlined_call_operand.vmem [shape: f32[1,288], index: 2, kind: input, shape index: {}]
  %s3 = inlined_call_operand.vmem [shape: bf16[18,288], index: 3, kind: output, shape index: {0}]
  %s4 = inlined_call_operand.vmem [shape: f32[2,2,288], index: 4, kind: output, shape index: {1}]
  %5 = xla_tuple %s3, %s4
  %s6 = sld [smem:[#allocation0]]
  $region89: #{ver_hor_bn_re.2} parent=0
    _
  %s8 = ssub.s32 1, %s6
  %s9 = scalar_select 0, %s8, %s6
  $region1: #{ver_hor_bn_re.2} parent=0
    #allocation2 [shape = 'u8[24576]{0}', space=vmem, size = 0x6000, scoped, tag = 'output window, operand 0']
    loop: start=0, step=1, limit=4
    $region2: #{ver_hor_bn_re.2} parent=1 // loop_pre_header
      _
    $region3: #{ver_hor_bn_re.2} parent=1 // loop_header
      %s11 = sphi 0, %s15
      %p12 = scmp.ge.s32.totalorder %s11, 4
      %s21 = sphi 0, %s23
      %s24 = sphi 0, %s21
      %s25 = sphi 0, %s24
      %s41 = sphi 0, %s25
      %s45 = sphi 0, %s45
      %s47 = sphi 0, %s45
      %s48 = sphi 0, %s47
      %s62 = sphi 0, %s48
      %s66 = sphi 0, %s66
      %s68 = sphi 0, %s66
      %s69 = sphi 0, %s68
      %s83 = sphi 0, %s69
      %s89 = sphi 0, %s91
      %s92 = sphi 0, %s89
      %s93 = sphi 0, %s92
      %s109 = sphi 0, %s93
      %s115 = sphi 0, %s117
      %s118 = sphi 0, %s115
      %s119 = sphi 0, %s118
      %s135 = sphi 0, %s119
    $region4: #{ver_hor_bn_re.2} parent=1 // loop_header_branch
      %14 = sbr.rel (%p12) target = $region8
    $region5: #{ver_hor_bn_re.2} parent=1 // loop_body
      %s16 = ssub.s32 %s11, 1
      %s17 = ssub.s32 %s11, 2
      %s18 = sadd.s32 %s11, 1
      %s19 = ssub.s32 %s11, %s18
      %p20 = scmp.eq.s32.totalorder %s19, 0
      %s22 = sadd.s32 %s21, 1
      %s23 = scalar_select %p20, %s21, %s22
      %p26 = pneg %p20
      %p27 = scmp.eq.s32.totalorder %s11, 1
      %p28 = por %p26, %p27
      %p29 = scmp.ne.s32.totalorder %s21, %s24
      %p30 = scmp.eq.s32.totalorder %s11, 0
      %p31 = por %p29, %p30
      %p32 = scmp.ne.s32.totalorder %s21, %s24
      %p33 = scmp.eq.s32.totalorder %s16, 1
      %p34 = por %p32, %p33
      %p35 = scmp.ne.s32.totalorder %s24, %s25
      %p36 = scmp.eq.s32.totalorder %s16, 0
      %p37 = por %p35, %p36
      %p38 = scmp.ne.s32.totalorder %s24, %s25
      %p39 = scmp.eq.s32.totalorder %s17, 1
      %p40 = por %p38, %p39
      %p42 = scmp.ne.s32.totalorder %s25, %s41
      %p43 = scmp.eq.s32.totalorder %s17, 0
      %p44 = por %p42, %p43
      %s46 = sadd.s32 %s45, 1
      %p49 = scmp.eq.s32.totalorder %s11, 1
      %p50 = scmp.ne.s32.totalorder %s45, %s47
      %p51 = scmp.eq.s32.totalorder %s11, 0
      %p52 = por %p50, %p51
      %p53 = scmp.ne.s32.totalorder %s45, %s47
      %p54 = scmp.eq.s32.totalorder %s16, 1
      %p55 = por %p53, %p54
      %p56 = scmp.ne.s32.totalorder %s47, %s48
      %p57 = scmp.eq.s32.totalorder %s16, 0
      %p58 = por %p56, %p57
      %p59 = scmp.ne.s32.totalorder %s47, %s48
      %p60 = scmp.eq.s32.totalorder %s17, 1
      %p61 = por %p59, %p60
      %p63 = scmp.ne.s32.totalorder %s48, %s62
      %p64 = scmp.eq.s32.totalorder %s17, 0
      %p65 = por %p63, %p64
      %s67 = sadd.s32 %s66, 1
      %p70 = scmp.eq.s32.totalorder %s11, 1
      %p71 = scmp.ne.s32.totalorder %s66, %s68
      %p72 = scmp.eq.s32.totalorder %s11, 0
      %p73 = por %p71, %p72
      %p74 = scmp.ne.s32.totalorder %s66, %s68
      %p75 = scmp.eq.s32.totalorder %s16, 1
      %p76 = por %p74, %p75
      %p77 = scmp.ne.s32.totalorder %s68, %s69
      %p78 = scmp.eq.s32.totalorder %s16, 0
      %p79 = por %p77, %p78
      %p80 = scmp.ne.s32.totalorder %s68, %s69
      %p81 = scmp.eq.s32.totalorder %s17, 1
      %p82 = por %p80, %p81
      %p84 = scmp.ne.s32.totalorder %s69, %s83
      %p85 = scmp.eq.s32.totalorder %s17, 0
      %p86 = por %p84, %p85
      %s87 = ssub.s32 %s11, %s18
      %p88 = scmp.eq.s32.totalorder %s87, 0
      %s90 = sadd.s32 %s89, 1
      %s91 = scalar_select %p88, %s89, %s90
      %p94 = pneg %p88
      %p95 = scmp.eq.s32.totalorder %s11, 1
      %p96 = por %p94, %p95
      %p97 = scmp.ne.s32.totalorder %s89, %s92
      %p98 = scmp.eq.s32.totalorder %s11, 0
      %p99 = por %p97, %p98
      %p100 = scmp.ne.s32.totalorder %s89, %s92
      %p101 = scmp.eq.s32.totalorder %s16, 1
      %p102 = por %p100, %p101
      %p103 = scmp.ne.s32.totalorder %s92, %s93
      %p104 = scmp.eq.s32.totalorder %s16, 0
      %p105 = por %p103, %p104
      %p106 = scmp.ne.s32.totalorder %s92, %s93
      %p107 = scmp.eq.s32.totalorder %s17, 1
      %p108 = por %p106, %p107
      %p110 = scmp.ne.s32.totalorder %s93, %s109
      %p111 = scmp.eq.s32.totalorder %s17, 0
      %p112 = por %p110, %p111
      %s113 = ssub.s32 %s11, %s18
      %p114 = scmp.eq.s32.totalorder %s113, 0
      %s116 = sadd.s32 %s115, 1
      %s117 = scalar_select %p114, %s115, %s116
      %p120 = pneg %p114
      %p121 = scmp.eq.s32.totalorder %s11, 1
      %p122 = por %p120, %p121
      %p123 = scmp.ne.s32.totalorder %s115, %s118
      %p124 = scmp.eq.s32.totalorder %s11, 0
      %p125 = por %p123, %p124
      %p126 = scmp.ne.s32.totalorder %s115, %s118
      %p127 = scmp.eq.s32.totalorder %s16, 1
      %p128 = por %p126, %p127
      %p129 = scmp.ne.s32.totalorder %s118, %s119
      %p130 = scmp.eq.s32.totalorder %s16, 0
      %p131 = por %p129, %p130
      %p132 = scmp.ne.s32.totalorder %s118, %s119
      %p133 = scmp.eq.s32.totalorder %s17, 1
      %p134 = por %p132, %p133
      %p136 = scmp.ne.s32.totalorder %s119, %s135
      %p137 = scmp.eq.s32.totalorder %s17, 0
      %p138 = por %p136, %p137
      %p139 = scmp.le.s32.totalorder 1, %s11
      %p140 = scmp.lt.s32.totalorder %s11, 3
      %p141 = pnand %p139, %p140
      %p142 = pneg %p141
      // Predicated region
      $region9: #{ver_hor_bn_re.2} parent=5 // pred_check
        _
      $region10: #{ver_hor_bn_re.2} parent=5 // pred_check_branch
        %144 = sbr.rel (%p141) target = $region12
      $region11: #{ver_hor_bn_re.2} parent=5 // pred_region
        %s145 = ssub.s32 %s11, 1
        // Predicated region
        $region13: #{ver_hor_bn_re.2} parent=11 // pred_check
          %p146 = pneg %p58
        $region14: #{ver_hor_bn_re.2} parent=11 // pred_check_branch
          %148 = sbr.rel (%p146) target = $region16
        $region15: #{ver_hor_bn_re.2} parent=11 // pred_region
          _
        $region16: #{ver_hor_bn_re.2} parent=11 // pred_fallthru
          _
        // Predicated region
        $region17: #{ver_hor_bn_re.2} parent=11 // pred_check
          %p149 = pneg %p79
        $region18: #{ver_hor_bn_re.2} parent=11 // pred_check_branch
          %151 = sbr.rel (%p149) target = $region20
        $region19: #{ver_hor_bn_re.2} parent=11 // pred_region
          _
        $region20: #{ver_hor_bn_re.2} parent=11 // pred_fallthru
          _
      $region12: #{ver_hor_bn_re.2} parent=5 // pred_fallthru
        _
      %p152 = scmp.lt.s32.totalorder %s11, 2
      // Predicated region
      $region21: #{ver_hor_bn_re.2} parent=5 // pred_check
        %p153 = pneg %p152
      $region22: #{ver_hor_bn_re.2} parent=5 // pred_check_branch
        %155 = sbr.rel (%p153) target = $region24
      $region23: #{ver_hor_bn_re.2} parent=5 // pred_region
        // Predicated region
        $region25: #{ver_hor_bn_re.2} parent=23 // pred_check
          %p156 = pneg %p31
        $region26: #{ver_hor_bn_re.2} parent=23 // pred_check_branch
          %158 = sbr.rel (%p156) target = $region28
        $region27: #{ver_hor_bn_re.2} parent=23 // pred_region
          %s159 = smul.u32 2, %s11
          %s160 = ssub.s32 3, %s159
          %p161 = scmp.lt.s32.totalorder %s160, 2
          %s162 = scalar_select %p161, %s160, 2
          %s163 = smul.u32 4, %s162
          %s164 = smul.u32 %s163, 4
          %p165 = scmp.lt.s32.totalorder %s159, 2
          %s166 = scalar_select %p165, %s159, 2
          %s167 = smul.addr %s166, 4
          %s168 = smul.addr %s167, 4
          %s169 = scalar_lea.vmem %s0, %s168
          %s170 = smul.u32 2, %s11
          %s171 = ssub.s32 3, %s170
          %p172 = scmp.lt.s32.totalorder %s171, 2
          %s173 = scalar_select %p172, %s171, 2
          %s174 = smul.u32 4, %s173
          %s175 = smul.u32 %s174, 4
        $region28: #{ver_hor_bn_re.2} parent=23 // pred_fallthru
          _
      $region24: #{ver_hor_bn_re.2} parent=5 // pred_fallthru
        _
      %p176 = scmp.le.s32.totalorder 1, %s11
      %p177 = scmp.lt.s32.totalorder %s11, 3
      %p178 = pnand %p176, %p177
      %p179 = pneg %p178
      // Predicated region
      $region29: #{ver_hor_bn_re.2} parent=5 // pred_check
        _
      $region30: #{ver_hor_bn_re.2} parent=5 // pred_check_branch
        %181 = sbr.rel (%p178) target = $region32
      $region31: #{ver_hor_bn_re.2} parent=5 // pred_region
        %s182 = ssub.s32 %s11, 1
        %s183 = smul.u32 2, %s16
        %s184 = ssub.s32 3, %s183
        %p185 = scmp.lt.s32.totalorder %s184, 2
        %s186 = scalar_select %p185, %s184, 2
        %s187 = smul.u32 4, %s186
        %s188 = smul.u32 %s187, 4
        %p189 = scmp.lt.s32.totalorder %s183, 2
        %s190 = scalar_select %p189, %s183, 2
        %s191 = smul.addr %s190, 4
        %s192 = smul.addr %s191, 4
        %s193 = scalar_lea.vmem %s0, %s192
        %p194 = pneg %p37
        %p195 = pneg %p34
        %p196 = pneg %p58
        %p197 = pneg %p55
        %p198 = pneg %p79
        %p199 = pneg %p76
        %p200 = pneg %p105
        %p201 = pneg %p102
        %s202 = sand.u32 %s92, 1
        %s203 = sand.u32 %s92, 1
        %s204 = smul.addr %s203, 24
        %s205 = scalar_lea.vmem [#allocation2], %s204
        %p206 = pneg %p131
        %p207 = pneg %p128
        %p208 = scmp.lt.s32.totalorder %s16, 1
        %s209 = scalar_select %p208, %s16, 1
        %s210 = smul.addr %s209, 3
        %s211 = smul.addr %s210, 2
        %s212 = scalar_lea.vmem %s4, %s211
        %s213 = smul.u32 2, %s16
        %s214 = ssub.s32 3, %s213
        %p215 = scmp.lt.s32.totalorder %s214, 2
        %s216 = scalar_select %p215, %s214, 2
        %s217 = smul.u32 4, %s216
        %s218 = smul.u32 %s217, 4
        %p219 = scmp.lt.s32.totalorder %s213, 2
        %s220 = scalar_select %p219, %s213, 2
        %s221 = smul.addr %s220, 4
        %s222 = smul.addr %s221, 4
        %s223 = scalar_lea.vmem %s0, %s222
        %s224 = smul.u32 2, %s16
        %s225 = ssub.s32 3, %s224
        %p226 = scmp.lt.s32.totalorder %s225, 2
        %s227 = scalar_select %p226, %s225, 2
        %s228 = smul.u32 4, %s227
        %s229 = smul.u32 %s228, 4
        %s230 = smul.u32 2, %s16
        %s231 = ssub.s32 3, %s230
        %p232 = scmp.lt.s32.totalorder %s231, 2
        %s233 = scalar_select %p232, %s231, 2
        %s234 = smul.u32 4, %s233
        %s235 = smul.u32 %s234, 3
        %p236 = scmp.lt.s32.totalorder %s16, 1
        %s237 = scalar_select %p236, %s16, 1
        %s238 = smul.addr %s237, 3
        %s239 = smul.addr %s238, 2
        %s240 = scalar_lea.vmem %s4, %s239
        %v242 = vld [vmem:[%s223] sm:$0xff]
        %v243 = vld [vmem:[%s223 + $0x8] sm:$0xff]
        %v244 = vld [vmem:[%s223 + $0x10] sm:$0xff]
        %v245 = vld [vmem:[%s223 + $0x18] sm:$0xff]
        %v246 = vlaneseq
        %v247 = vshrl.u32 %v246, 7
        %v248 = vadd.s32 %v247, 8
        %s249 = smul.u32 %s16, 16
        %v250 = vstv %s249
        %v251 = vadd.s32 %v247, %v250
        %v252 = vadd.s32 %v248, %v250
        %vm253 = vcmp.lt.s32.totalorder %v251, 18
        %vm254 = vcmp.lt.s32.totalorder %v252, 18
        %v255 = vsel %vm253, 1, 0
        %v256 = vsel %vm254, 1, 0
        %vm257 = vcmp.eq.s32.totalorder %v255, 1
        %vm258 = vcmp.eq.s32.totalorder %v256, 1
        %vm259 = vmpackc.low %vm257, %vm257
        %vm260 = vmpackc.low %vm258, %vm258
        %v261 = vsel %vm259, %v242, 0
        %v262 = vsel %vm259, %v243, 0
        %v263 = vsel %vm260, %v244, 0
        %v264 = vsel %vm260, %v245, 0
        %v265 = vld [vmem:[%s1] sm:$0xff]
        %v266 = vld [vmem:[%s1 + $0x8] sm:$0xf]
        %v267 = vld [vmem:[%s1 + $0xc] sm:$0xff]
        %v268 = vld [vmem:[%s1 + $0x14] sm:$0xf]
        %v269 = vld [vmem:[%s1 + $0x18] sm:$0xff]
        %v270 = vld [vmem:[%s1 + $0x20] sm:$0xf]
        %v271 = vld [vmem:[%s1 + $0x24] sm:$0xff]
        %v272 = vld [vmem:[%s1 + $0x2c] sm:$0xf]
        %v273 = vld [vmem:[%s1 + $0x30] sm:$0xff]
        %v274 = vld [vmem:[%s1 + $0x38] sm:$0xf]
        %v275 = vld [vmem:[%s1 + $0x3c] sm:$0xff]
        %v276 = vld [vmem:[%s1 + $0x44] sm:$0xf]
        %v277 = vld [vmem:[%s1 + $0x48] sm:$0xff]
        %v278 = vld [vmem:[%s1 + $0x50] sm:$0xf]
        %v279 = vld [vmem:[%s1 + $0x54] sm:$0xff]
        %v280 = vld [vmem:[%s1 + $0x5c] sm:$0xf]
        %v281 = vld [vmem:[%s1 + $0x60] sm:$0xff]
        %v282 = vld [vmem:[%s1 + $0x68] sm:$0xf]
        %v283 = vld [vmem:[%s1 + $0x6c] sm:$0xff]
        %v284 = vld [vmem:[%s1 + $0x74] sm:$0xf]
        %v285 = vld [vmem:[%s1 + $0x78] sm:$0xff]
        %v286 = vld [vmem:[%s1 + $0x80] sm:$0xf]
        %v287 = vld [vmem:[%s1 + $0x84] sm:$0xff]
        %v288 = vld [vmem:[%s1 + $0x8c] sm:$0xf]
        %v289 = vld [vmem:[%s1 + $0x90] sm:$0xff]
        %v290 = vld [vmem:[%s1 + $0x98] sm:$0xf]
        %v291 = vld [vmem:[%s1 + $0x9c] sm:$0xff]
        %v292 = vld [vmem:[%s1 + $0xa4] sm:$0xf]
        %v293 = vld [vmem:[%s1 + $0xa8] sm:$0xff]
        %v294 = vld [vmem:[%s1 + $0xb0] sm:$0xf]
        %v295 = vld [vmem:[%s1 + $0xb4] sm:$0xff]
        %v296 = vld [vmem:[%s1 + $0xbc] sm:$0xf]
        %v297 = vld [vmem:[%s1 + $0xc0] sm:$0xff]
        %v298 = vld [vmem:[%s1 + $0xc8] sm:$0xf]
        %v299 = vld [vmem:[%s1 + $0xcc] sm:$0xff]
        %v300 = vld [vmem:[%s1 + $0xd4] sm:$0xf]
        %v301 = vld [vmem:[%s1 + $0xd8] sm:$0xff]
        %v302 = vld [vmem:[%s1 + $0xe0] sm:$0xf]
        %v303 = vld [vmem:[%s1 + $0xe4] sm:$0xff]
        %v304 = vld [vmem:[%s1 + $0xec] sm:$0xf]
        %v305 = vld [vmem:[%s1 + $0xf0] sm:$0xff]
        %v306 = vld [vmem:[%s1 + $0xf8] sm:$0xf]
        %v307 = vld [vmem:[%s1 + $0xfc] sm:$0xff]
        %v308 = vld [vmem:[%s1 + $0x104] sm:$0xf]
        %v309 = vld [vmem:[%s1 + $0x108] sm:$0xff]
        %v310 = vld [vmem:[%s1 + $0x110] sm:$0xf]
        %v311 = vld [vmem:[%s1 + $0x114] sm:$0xff]
        %v312 = vld [vmem:[%s1 + $0x11c] sm:$0xf]
        %v313 = vld [vmem:[%s1 + $0x120] sm:$0xff]
        %v314 = vld [vmem:[%s1 + $0x128] sm:$0xf]
        %v315 = vld [vmem:[%s1 + $0x12c] sm:$0xff]
        %v316 = vld [vmem:[%s1 + $0x134] sm:$0xf]
        %v317 = vld [vmem:[%s1 + $0x138] sm:$0xff]
        %v318 = vld [vmem:[%s1 + $0x140] sm:$0xf]
        %v319 = vld [vmem:[%s1 + $0x144] sm:$0xff]
        %v320 = vld [vmem:[%s1 + $0x14c] sm:$0xf]
        %v321 = vld [vmem:[%s1 + $0x150] sm:$0xff]
        %v322 = vld [vmem:[%s1 + $0x158] sm:$0xf]
        %v323 = vld [vmem:[%s1 + $0x15c] sm:$0xff]
        %v324 = vld [vmem:[%s1 + $0x164] sm:$0xf]
        %v325 = vld [vmem:[%s1 + $0x168] sm:$0xff]
        %v326 = vld [vmem:[%s1 + $0x170] sm:$0xf]
        %v327 = vld [vmem:[%s1 + $0x174] sm:$0xff]
        %v328 = vld [vmem:[%s1 + $0x17c] sm:$0xf]
        %v329 = vld [vmem:[%s1 + $0x180] sm:$0xff]
        %v330 = vld [vmem:[%s1 + $0x188] sm:$0xf]
        %v331 = vld [vmem:[%s1 + $0x18c] sm:$0xff]
        %v332 = vld [vmem:[%s1 + $0x194] sm:$0xf]
        %v333 = vld [vmem:[%s1 + $0x198] sm:$0xff]
        %v334 = vld [vmem:[%s1 + $0x1a0] sm:$0xf]
        %v335 = vld [vmem:[%s1 + $0x1a4] sm:$0xff]
        %v336 = vld [vmem:[%s1 + $0x1ac] sm:$0xf]
        %v337 = vld [vmem:[%s1 + $0x1b0] sm:$0xff]
        %v338 = vld [vmem:[%s1 + $0x1b8] sm:$0xf]
        %v339 = vld [vmem:[%s1 + $0x1bc] sm:$0xff]
        %v340 = vld [vmem:[%s1 + $0x1c4] sm:$0xf]
        %v341 = vld [vmem:[%s1 + $0x1c8] sm:$0xff]
        %v342 = vld [vmem:[%s1 + $0x1d0] sm:$0xf]
        %v343 = vld [vmem:[%s1 + $0x1d4] sm:$0xff]
        %v344 = vld [vmem:[%s1 + $0x1dc] sm:$0xf]
        %v345 = vld [vmem:[%s1 + $0x1e0] sm:$0xff]
        %v346 = vld [vmem:[%s1 + $0x1e8] sm:$0xf]
        %v347 = vld [vmem:[%s1 + $0x1ec] sm:$0xff]
        %v348 = vld [vmem:[%s1 + $0x1f4] sm:$0xf]
        %v349 = vld [vmem:[%s1 + $0x1f8] sm:$0xff]
        %v350 = vld [vmem:[%s1 + $0x200] sm:$0xf]
        %v351 = vld [vmem:[%s1 + $0x204] sm:$0xff]
        %v352 = vld [vmem:[%s1 + $0x20c] sm:$0xf]
        %v353 = vld [vmem:[%s1 + $0x210] sm:$0xff]
        %v354 = vld [vmem:[%s1 + $0x218] sm:$0xf]
        %v355 = vld [vmem:[%s1 + $0x21c] sm:$0xff]
        %v356 = vld [vmem:[%s1 + $0x224] sm:$0xf]
        %v357 = vld [vmem:[%s1 + $0x228] sm:$0xff]
        %v358 = vld [vmem:[%s1 + $0x230] sm:$0xf]
        %v359 = vld [vmem:[%s1 + $0x234] sm:$0xff]
        %v360 = vld [vmem:[%s1 + $0x23c] sm:$0xf]
        %v361 = vld [vmem:[%s1 + $0x240] sm:$0xff]
        %v362 = vld [vmem:[%s1 + $0x248] sm:$0xf]
        %v363 = vld [vmem:[%s1 + $0x24c] sm:$0xff]
        %v364 = vld [vmem:[%s1 + $0x254] sm:$0xf]
        %v365 = vld [vmem:[%s1 + $0x258] sm:$0xff]
        %v366 = vld [vmem:[%s1 + $0x260] sm:$0xf]
        %v367 = vld [vmem:[%s1 + $0x264] sm:$0xff]
        %v368 = vld [vmem:[%s1 + $0x26c] sm:$0xf]
        %v369 = vld [vmem:[%s1 + $0x270] sm:$0xff]
        %v370 = vld [vmem:[%s1 + $0x278] sm:$0xf]
        %v371 = vld [vmem:[%s1 + $0x27c] sm:$0xff]
        %v372 = vld [vmem:[%s1 + $0x284] sm:$0xf]
        %v373 = vld [vmem:[%s1 + $0x288] sm:$0xff]
        %v374 = vld [vmem:[%s1 + $0x290] sm:$0xf]
        %v375 = vld [vmem:[%s1 + $0x294] sm:$0xff]
        %v376 = vld [vmem:[%s1 + $0x29c] sm:$0xf]
        %v377 = vld [vmem:[%s1 + $0x2a0] sm:$0xff]
        %v378 = vld [vmem:[%s1 + $0x2a8] sm:$0xf]
        %v379 = vld [vmem:[%s1 + $0x2ac] sm:$0xff]
        %v380 = vld [vmem:[%s1 + $0x2b4] sm:$0xf]
        %v381 = vld [vmem:[%s1 + $0x2b8] sm:$0xff]
        %v382 = vld [vmem:[%s1 + $0x2c0] sm:$0xf]
        %v383 = vld [vmem:[%s1 + $0x2c4] sm:$0xff]
        %v384 = vld [vmem:[%s1 + $0x2cc] sm:$0xf]
        %v385 = vld [vmem:[%s1 + $0x2d0] sm:$0xff]
        %v386 = vld [vmem:[%s1 + $0x2d8] sm:$0xf]
        %v387 = vld [vmem:[%s1 + $0x2dc] sm:$0xff]
        %v388 = vld [vmem:[%s1 + $0x2e4] sm:$0xf]
        %v389 = vld [vmem:[%s1 + $0x2e8] sm:$0xff]
        %v390 = vld [vmem:[%s1 + $0x2f0] sm:$0xf]
        %v391 = vld [vmem:[%s1 + $0x2f4] sm:$0xff]
        %v392 = vld [vmem:[%s1 + $0x2fc] sm:$0xf]
        %v397 = vunpack.c.l.b16 %v261
        %v398 = vunpack.c.h.b16 %v261
        %v399 = vunpack.c.l.b16 %v262
        %v400 = vunpack.c.h.b16 %v262
        %v401 = vunpack.c.l.b16 %v263
        %v402 = vunpack.c.h.b16 %v263
        %v403 = vunpack.c.l.b16 %v264
        %v404 = vunpack.c.h.b16 %v264
        %v405 = vpack.c.b16 %v401, %v397
        %v406 = vpack.c.b16 %v402, %v398
        %v407 = vpack.c.b16 %v403, %v399
        %v408 = vpack.c.b16 %v404, %v400
        %v541 = vunpack.c.l.b16 %v265
        %v542 = vunpack.c.h.b16 %v265
        %v543 = vunpack.c.l.b16 %v266
        %v544 = vunpack.c.l.b16 %v267
        %v545 = vunpack.c.h.b16 %v267
        %v546 = vunpack.c.l.b16 %v268
        %v547 = vunpack.c.l.b16 %v269
        %v548 = vunpack.c.h.b16 %v269
        %v549 = vunpack.c.l.b16 %v270
        %v550 = vunpack.c.l.b16 %v271
        %v551 = vunpack.c.h.b16 %v271
        %v552 = vunpack.c.l.b16 %v272
        %v553 = vunpack.c.l.b16 %v273
        %v554 = vunpack.c.h.b16 %v273
        %v555 = vunpack.c.l.b16 %v274
        %v556 = vunpack.c.l.b16 %v275
        %v557 = vunpack.c.h.b16 %v275
        %v558 = vunpack.c.l.b16 %v276
        %v559 = vunpack.c.l.b16 %v277
        %v560 = vunpack.c.h.b16 %v277
        %v561 = vunpack.c.l.b16 %v278
        %v562 = vunpack.c.l.b16 %v279
        %v563 = vunpack.c.h.b16 %v279
        %v564 = vunpack.c.l.b16 %v280
        %v565 = vunpack.c.l.b16 %v281
        %v566 = vunpack.c.h.b16 %v281
        %v567 = vunpack.c.l.b16 %v282
        %v568 = vunpack.c.l.b16 %v283
        %v569 = vunpack.c.h.b16 %v283
        %v570 = vunpack.c.l.b16 %v284
        %v571 = vunpack.c.l.b16 %v285
        %v572 = vunpack.c.h.b16 %v285
        %v573 = vunpack.c.l.b16 %v286
        %v574 = vunpack.c.l.b16 %v287
        %v575 = vunpack.c.h.b16 %v287
        %v576 = vunpack.c.l.b16 %v288
        %v577 = vunpack.c.l.b16 %v289
        %v578 = vunpack.c.h.b16 %v289
        %v579 = vunpack.c.l.b16 %v290
        %v580 = vunpack.c.l.b16 %v291
        %v581 = vunpack.c.h.b16 %v291
        %v582 = vunpack.c.l.b16 %v292
        %v583 = vunpack.c.l.b16 %v293
        %v584 = vunpack.c.h.b16 %v293
        %v585 = vunpack.c.l.b16 %v294
        %v586 = vunpack.c.l.b16 %v295
        %v587 = vunpack.c.h.b16 %v295
        %v588 = vunpack.c.l.b16 %v296
        %v589 = vunpack.c.l.b16 %v297
        %v590 = vunpack.c.h.b16 %v297
        %v591 = vunpack.c.l.b16 %v298
        %v592 = vunpack.c.l.b16 %v299
        %v593 = vunpack.c.h.b16 %v299
        %v594 = vunpack.c.l.b16 %v300
        %v595 = vunpack.c.l.b16 %v301
        %v596 = vunpack.c.h.b16 %v301
        %v597 = vunpack.c.l.b16 %v302
        %v598 = vunpack.c.l.b16 %v303
        %v599 = vunpack.c.h.b16 %v303
        %v600 = vunpack.c.l.b16 %v304
        %v601 = vunpack.c.l.b16 %v305
        %v602 = vunpack.c.h.b16 %v305
        %v603 = vunpack.c.l.b16 %v306
        %v604 = vunpack.c.l.b16 %v307
        %v605 = vunpack.c.h.b16 %v307
        %v606 = vunpack.c.l.b16 %v308
        %v607 = vunpack.c.l.b16 %v309
        %v608 = vunpack.c.h.b16 %v309
        %v609 = vunpack.c.l.b16 %v310
        %v610 = vunpack.c.l.b16 %v311
        %v611 = vunpack.c.h.b16 %v311
        %v612 = vunpack.c.l.b16 %v312
        %v613 = vunpack.c.l.b16 %v313
        %v614 = vunpack.c.h.b16 %v313
        %v615 = vunpack.c.l.b16 %v314
        %v616 = vunpack.c.l.b16 %v315
        %v617 = vunpack.c.h.b16 %v315
        %v618 = vunpack.c.l.b16 %v316
        %v619 = vunpack.c.l.b16 %v317
        %v620 = vunpack.c.h.b16 %v317
        %v621 = vunpack.c.l.b16 %v318
        %v622 = vunpack.c.l.b16 %v319
        %v623 = vunpack.c.h.b16 %v319
        %v624 = vunpack.c.l.b16 %v320
        %v625 = vunpack.c.l.b16 %v321
        %v626 = vunpack.c.h.b16 %v321
        %v627 = vunpack.c.l.b16 %v322
        %v628 = vunpack.c.l.b16 %v323
        %v629 = vunpack.c.h.b16 %v323
        %v630 = vunpack.c.l.b16 %v324
        %v631 = vunpack.c.l.b16 %v325
        %v632 = vunpack.c.h.b16 %v325
        %v633 = vunpack.c.l.b16 %v326
        %v634 = vunpack.c.l.b16 %v327
        %v635 = vunpack.c.h.b16 %v327
        %v636 = vunpack.c.l.b16 %v328
        %v637 = vunpack.c.l.b16 %v329
        %v638 = vunpack.c.h.b16 %v329
        %v639 = vunpack.c.l.b16 %v330
        %v640 = vunpack.c.l.b16 %v331
        %v641 = vunpack.c.h.b16 %v331
        %v642 = vunpack.c.l.b16 %v332
        %v643 = vunpack.c.l.b16 %v333
        %v644 = vunpack.c.h.b16 %v333
        %v645 = vunpack.c.l.b16 %v334
        %v646 = vunpack.c.l.b16 %v335
        %v647 = vunpack.c.h.b16 %v335
        %v648 = vunpack.c.l.b16 %v336
        %v649 = vunpack.c.l.b16 %v337
        %v650 = vunpack.c.h.b16 %v337
        %v651 = vunpack.c.l.b16 %v338
        %v652 = vunpack.c.l.b16 %v339
        %v653 = vunpack.c.h.b16 %v339
        %v654 = vunpack.c.l.b16 %v340
        %v655 = vunpack.c.l.b16 %v341
        %v656 = vunpack.c.h.b16 %v341
        %v657 = vunpack.c.l.b16 %v342
        %v658 = vunpack.c.l.b16 %v343
        %v659 = vunpack.c.h.b16 %v343
        %v660 = vunpack.c.l.b16 %v344
        %v661 = vunpack.c.l.b16 %v345
        %v662 = vunpack.c.h.b16 %v345
        %v663 = vunpack.c.l.b16 %v346
        %v664 = vunpack.c.l.b16 %v347
        %v665 = vunpack.c.h.b16 %v347
        %v666 = vunpack.c.l.b16 %v348
        %v667 = vunpack.c.l.b16 %v349
        %v668 = vunpack.c.h.b16 %v349
        %v669 = vunpack.c.l.b16 %v350
        %v670 = vunpack.c.l.b16 %v351
        %v671 = vunpack.c.h.b16 %v351
        %v672 = vunpack.c.l.b16 %v352
        %v673 = vunpack.c.l.b16 %v353
        %v674 = vunpack.c.h.b16 %v353
        %v675 = vunpack.c.l.b16 %v354
        %v676 = vunpack.c.l.b16 %v355
        %v677 = vunpack.c.h.b16 %v355
        %v678 = vunpack.c.l.b16 %v356
        %v679 = vunpack.c.l.b16 %v357
        %v680 = vunpack.c.h.b16 %v357
        %v681 = vunpack.c.l.b16 %v358
        %v682 = vunpack.c.l.b16 %v359
        %v683 = vunpack.c.h.b16 %v359
        %v684 = vunpack.c.l.b16 %v360
        %v685 = vunpack.c.l.b16 %v361
        %v686 = vunpack.c.h.b16 %v361
        %v687 = vunpack.c.l.b16 %v362
        %v688 = vunpack.c.l.b16 %v363
        %v689 = vunpack.c.h.b16 %v363
        %v690 = vunpack.c.l.b16 %v364
        %v691 = vunpack.c.l.b16 %v365
        %v692 = vunpack.c.h.b16 %v365
        %v693 = vunpack.c.l.b16 %v366
        %v694 = vunpack.c.l.b16 %v367
        %v695 = vunpack.c.h.b16 %v367
        %v696 = vunpack.c.l.b16 %v368
        %v697 = vunpack.c.l.b16 %v369
        %v698 = vunpack.c.h.b16 %v369
        %v699 = vunpack.c.l.b16 %v370
        %v700 = vunpack.c.l.b16 %v371
        %v701 = vunpack.c.h.b16 %v371
        %v702 = vunpack.c.l.b16 %v372
        %v703 = vunpack.c.l.b16 %v373
        %v704 = vunpack.c.h.b16 %v373
        %v705 = vunpack.c.l.b16 %v374
        %v706 = vunpack.c.l.b16 %v375
        %v707 = vunpack.c.h.b16 %v375
        %v708 = vunpack.c.l.b16 %v376
        %v709 = vunpack.c.l.b16 %v377
        %v710 = vunpack.c.h.b16 %v377
        %v711 = vunpack.c.l.b16 %v378
        %v712 = vunpack.c.l.b16 %v379
        %v713 = vunpack.c.h.b16 %v379
        %v714 = vunpack.c.l.b16 %v380
        %v715 = vunpack.c.l.b16 %v381
        %v716 = vunpack.c.h.b16 %v381
        %v717 = vunpack.c.l.b16 %v382
        %v718 = vunpack.c.l.b16 %v383
        %v719 = vunpack.c.h.b16 %v383
        %v720 = vunpack.c.l.b16 %v384
        %v721 = vunpack.c.l.b16 %v385
        %v722 = vunpack.c.h.b16 %v385
        %v723 = vunpack.c.l.b16 %v386
        %v724 = vunpack.c.l.b16 %v387
        %v725 = vunpack.c.h.b16 %v387
        %v726 = vunpack.c.l.b16 %v388
        %v727 = vunpack.c.l.b16 %v389
        %v728 = vunpack.c.h.b16 %v389
        %v729 = vunpack.c.l.b16 %v390
        %v730 = vunpack.c.l.b16 %v391
        %v731 = vunpack.c.h.b16 %v391
        %v732 = vunpack.c.l.b16 %v392
        %v733 = vpack.c.b16 %v544, %v541
        %v734 = vpack.c.b16 %v545, %v542
        %v735 = vpack.c.b16 %v546, %v543
        %v736 = vpack.c.b16 %v550, %v547
        %v737 = vpack.c.b16 %v551, %v548
        %v738 = vpack.c.b16 %v552, %v549
        %v739 = vpack.c.b16 %v556, %v553
        %v740 = vpack.c.b16 %v557, %v554
        %v741 = vpack.c.b16 %v558, %v555
        %v742 = vpack.c.b16 %v562, %v559
        %v743 = vpack.c.b16 %v563, %v560
        %v744 = vpack.c.b16 %v564, %v561
        %v745 = vpack.c.b16 %v568, %v565
        %v746 = vpack.c.b16 %v569, %v566
        %v747 = vpack.c.b16 %v570, %v567
        %v748 = vpack.c.b16 %v574, %v571
        %v749 = vpack.c.b16 %v575, %v572
        %v750 = vpack.c.b16 %v576, %v573
        %v751 = vpack.c.b16 %v580, %v577
        %v752 = vpack.c.b16 %v581, %v578
        %v753 = vpack.c.b16 %v582, %v579
        %v754 = vpack.c.b16 %v586, %v583
        %v755 = vpack.c.b16 %v587, %v584
        %v756 = vpack.c.b16 %v588, %v585
        %v757 = vpack.c.b16 %v592, %v589
        %v758 = vpack.c.b16 %v593, %v590
        %v759 = vpack.c.b16 %v594, %v591
        %v760 = vpack.c.b16 %v598, %v595
        %v761 = vpack.c.b16 %v599, %v596
        %v762 = vpack.c.b16 %v600, %v597
        %v763 = vpack.c.b16 %v604, %v601
        %v764 = vpack.c.b16 %v605, %v602
        %v765 = vpack.c.b16 %v606, %v603
        %v766 = vpack.c.b16 %v610, %v607
        %v767 = vpack.c.b16 %v611, %v608
        %v768 = vpack.c.b16 %v612, %v609
        %v769 = vpack.c.b16 %v616, %v613
        %v770 = vpack.c.b16 %v617, %v614
        %v771 = vpack.c.b16 %v618, %v615
        %v772 = vpack.c.b16 %v622, %v619
        %v773 = vpack.c.b16 %v623, %v620
        %v774 = vpack.c.b16 %v624, %v621
        %v775 = vpack.c.b16 %v628, %v625
        %v776 = vpack.c.b16 %v629, %v626
        %v777 = vpack.c.b16 %v630, %v627
        %v778 = vpack.c.b16 %v634, %v631
        %v779 = vpack.c.b16 %v635, %v632
        %v780 = vpack.c.b16 %v636, %v633
        %v781 = vpack.c.b16 %v640, %v637
        %v782 = vpack.c.b16 %v641, %v638
        %v783 = vpack.c.b16 %v642, %v639
        %v784 = vpack.c.b16 %v646, %v643
        %v785 = vpack.c.b16 %v647, %v644
        %v786 = vpack.c.b16 %v648, %v645
        %v787 = vpack.c.b16 %v652, %v649
        %v788 = vpack.c.b16 %v653, %v650
        %v789 = vpack.c.b16 %v654, %v651
        %v790 = vpack.c.b16 %v658, %v655
        %v791 = vpack.c.b16 %v659, %v656
        %v792 = vpack.c.b16 %v660, %v657
        %v793 = vpack.c.b16 %v664, %v661
        %v794 = vpack.c.b16 %v665, %v662
        %v795 = vpack.c.b16 %v666, %v663
        %v796 = vpack.c.b16 %v670, %v667
        %v797 = vpack.c.b16 %v671, %v668
        %v798 = vpack.c.b16 %v672, %v669
        %v799 = vpack.c.b16 %v676, %v673
        %v800 = vpack.c.b16 %v677, %v674
        %v801 = vpack.c.b16 %v678, %v675
        %v802 = vpack.c.b16 %v682, %v679
        %v803 = vpack.c.b16 %v683, %v680
        %v804 = vpack.c.b16 %v684, %v681
        %v805 = vpack.c.b16 %v688, %v685
        %v806 = vpack.c.b16 %v689, %v686
        %v807 = vpack.c.b16 %v690, %v687
        %v808 = vpack.c.b16 %v694, %v691
        %v809 = vpack.c.b16 %v695, %v692
        %v810 = vpack.c.b16 %v696, %v693
        %v811 = vpack.c.b16 %v700, %v697
        %v812 = vpack.c.b16 %v701, %v698
        %v813 = vpack.c.b16 %v702, %v699
        %v814 = vpack.c.b16 %v706, %v703
        %v815 = vpack.c.b16 %v707, %v704
        %v816 = vpack.c.b16 %v708, %v705
        %v817 = vpack.c.b16 %v712, %v709
        %v818 = vpack.c.b16 %v713, %v710
        %v819 = vpack.c.b16 %v714, %v711
        %v820 = vpack.c.b16 %v718, %v715
        %v821 = vpack.c.b16 %v719, %v716
        %v822 = vpack.c.b16 %v720, %v717
        %v823 = vpack.c.b16 %v724, %v721
        %v824 = vpack.c.b16 %v725, %v722
        %v825 = vpack.c.b16 %v726, %v723
        %v826 = vpack.c.b16 %v730, %v727
        %v827 = vpack.c.b16 %v731, %v728
        %v828 = vpack.c.b16 %v732, %v729
        %925 = vmatpush.bf16.msra.mxu0 %v754
        %926 = vmatpush.bf16.msra.mxu0 %v751
        %927 = vmatpush.bf16.msra.mxu0 %v748
        %928 = vmatpush.bf16.msra.mxu0 %v745
        %929 = vmatpush.bf16.msra.mxu0 %v742
        %930 = vmatpush.bf16.msra.mxu0 %v739
        %931 = vmatpush.bf16.msra.mxu0 %v736
        %932 = vmatpush.bf16.msra.mxu0 %v733
        %933 = vmatmul.bf16.gmra.mxu0 %v405
        %v934 = vpop.f32.mrf.mxu0
        %v935 = vadd.f32 0.0, %v934
        %v936 = vpop.f32.mrf.mxu0
        %v937 = vadd.f32 0.0, %v936
        %938 = vdwg.mxu0
        %939 = vmatpush.bf16.msra.mxu0 %v778
        %940 = vmatpush.bf16.msra.mxu0 %v775
        %941 = vmatpush.bf16.msra.mxu0 %v772
        %942 = vmatpush.bf16.msra.mxu0 %v769
        %943 = vmatpush.bf16.msra.mxu0 %v766
        %944 = vmatpush.bf16.msra.mxu0 %v763
        %945 = vmatpush.bf16.msra.mxu0 %v760
        %946 = vmatpush.bf16.msra.mxu0 %v757
        %947 = vmatmul.bf16.gmra.mxu0 %v406
        %v948 = vpop.f32.mrf.mxu0
        %v949 = vadd.f32 %v935, %v948
        %v950 = vpop.f32.mrf.mxu0
        %v951 = vadd.f32 %v937, %v950
        %952 = vdwg.mxu0
        %953 = vmatpush.bf16.msra.mxu0 %v802
        %954 = vmatpush.bf16.msra.mxu0 %v799
        %955 = vmatpush.bf16.msra.mxu0 %v796
        %956 = vmatpush.bf16.msra.mxu0 %v793
        %957 = vmatpush.bf16.msra.mxu0 %v790
        %958 = vmatpush.bf16.msra.mxu0 %v787
        %959 = vmatpush.bf16.msra.mxu0 %v784
        %960 = vmatpush.bf16.msra.mxu0 %v781
        %961 = vmatmul.bf16.gmra.mxu0 %v407
        %v962 = vpop.f32.mrf.mxu0
        %v963 = vadd.f32 %v949, %v962
        %v964 = vpop.f32.mrf.mxu0
        %v965 = vadd.f32 %v951, %v964
        %966 = vdwg.mxu0
        %967 = vmatpush.bf16.msra.mxu0 %v826
        %968 = vmatpush.bf16.msra.mxu0 %v823
        %969 = vmatpush.bf16.msra.mxu0 %v820
        %970 = vmatpush.bf16.msra.mxu0 %v817
        %971 = vmatpush.bf16.msra.mxu0 %v814
        %972 = vmatpush.bf16.msra.mxu0 %v811
        %973 = vmatpush.bf16.msra.mxu0 %v808
        %974 = vmatpush.bf16.msra.mxu0 %v805
        %975 = vmatmul.bf16.gmra.mxu0 %v408
        %v976 = vpop.f32.mrf.mxu0
        %v977 = vadd.f32 %v963, %v976
        %v978 = vpop.f32.mrf.mxu0
        %v979 = vadd.f32 %v965, %v978
        %980 = vdwg.mxu0
        %981 = vmatpush.bf16.msra.mxu0 %v755
        %982 = vmatpush.bf16.msra.mxu0 %v752
        %983 = vmatpush.bf16.msra.mxu0 %v749
        %984 = vmatpush.bf16.msra.mxu0 %v746
        %985 = vmatpush.bf16.msra.mxu0 %v743
        %986 = vmatpush.bf16.msra.mxu0 %v740
        %987 = vmatpush.bf16.msra.mxu0 %v737
        %988 = vmatpush.bf16.msra.mxu0 %v734
        %989 = vmatmul.bf16.gmra.mxu0 %v405
        %v990 = vpop.f32.mrf.mxu0
        %v991 = vadd.f32 0.0, %v990
        %v992 = vpop.f32.mrf.mxu0
        %v993 = vadd.f32 0.0, %v992
        %994 = vdwg.mxu0
        %995 = vmatpush.bf16.msra.mxu0 %v779
        %996 = vmatpush.bf16.msra.mxu0 %v776
        %997 = vmatpush.bf16.msra.mxu0 %v773
        %998 = vmatpush.bf16.msra.mxu0 %v770
        %999 = vmatpush.bf16.msra.mxu0 %v767
        %1000 = vmatpush.bf16.msra.mxu0 %v764
        %1001 = vmatpush.bf16.msra.mxu0 %v761
        %1002 = vmatpush.bf16.msra.mxu0 %v758
        %1003 = vmatmul.bf16.gmra.mxu0 %v406
        %v1004 = vpop.f32.mrf.mxu0
        %v1005 = vadd.f32 %v991, %v1004
        %v1006 = vpop.f32.mrf.mxu0
        %v1007 = vadd.f32 %v993, %v1006
        %1008 = vdwg.mxu0
        %1009 = vmatpush.bf16.msra.mxu0 %v803
        %1010 = vmatpush.bf16.msra.mxu0 %v800
        %1011 = vmatpush.bf16.msra.mxu0 %v797
        %1012 = vmatpush.bf16.msra.mxu0 %v794
        %1013 = vmatpush.bf16.msra.mxu0 %v791
        %1014 = vmatpush.bf16.msra.mxu0 %v788
        %1015 = vmatpush.bf16.msra.mxu0 %v785
        %1016 = vmatpush.bf16.msra.mxu0 %v782
        %1017 = vmatmul.bf16.gmra.mxu0 %v407
        %v1018 = vpop.f32.mrf.mxu0
        %v1019 = vadd.f32 %v1005, %v1018
        %v1020 = vpop.f32.mrf.mxu0
        %v1021 = vadd.f32 %v1007, %v1020
        %1022 = vdwg.mxu0
        %1023 = vmatpush.bf16.msra.mxu0 %v827
        %1024 = vmatpush.bf16.msra.mxu0 %v824
        %1025 = vmatpush.bf16.msra.mxu0 %v821
        %1026 = vmatpush.bf16.msra.mxu0 %v818
        %1027 = vmatpush.bf16.msra.mxu0 %v815
        %1028 = vmatpush.bf16.msra.mxu0 %v812
        %1029 = vmatpush.bf16.msra.mxu0 %v809
        %1030 = vmatpush.bf16.msra.mxu0 %v806
        %1031 = vmatmul.bf16.gmra.mxu0 %v408
        %v1032 = vpop.f32.mrf.mxu0
        %v1033 = vadd.f32 %v1019, %v1032
        %v1034 = vpop.f32.mrf.mxu0
        %v1035 = vadd.f32 %v1021, %v1034
        %1036 = vdwg.mxu0
        %1037 = vmatpush.bf16.msra.mxu0 %v756
        %1038 = vmatpush.bf16.msra.mxu0 %v753
        %1039 = vmatpush.bf16.msra.mxu0 %v750
        %1040 = vmatpush.bf16.msra.mxu0 %v747
        %1041 = vmatpush.bf16.msra.mxu0 %v744
        %1042 = vmatpush.bf16.msra.mxu0 %v741
        %1043 = vmatpush.bf16.msra.mxu0 %v738
        %1044 = vmatpush.bf16.msra.mxu0 %v735
        %1045 = vmatmul.bf16.gmra.mxu0 %v405
        %v1046 = vpop.f32.mrf.mxu0
        %v1047 = vadd.f32 0.0, %v1046
        %v1048 = vpop.f32.mrf.mxu0
        %v1049 = vadd.f32 0.0, %v1048
        %1050 = vdwg.mxu0
        %1051 = vmatpush.bf16.msra.mxu0 %v780
        %1052 = vmatpush.bf16.msra.mxu0 %v777
        %1053 = vmatpush.bf16.msra.mxu0 %v774
        %1054 = vmatpush.bf16.msra.mxu0 %v771
        %1055 = vmatpush.bf16.msra.mxu0 %v768
        %1056 = vmatpush.bf16.msra.mxu0 %v765
        %1057 = vmatpush.bf16.msra.mxu0 %v762
        %1058 = vmatpush.bf16.msra.mxu0 %v759
        %1059 = vmatmul.bf16.gmra.mxu0 %v406
        %v1060 = vpop.f32.mrf.mxu0
        %v1061 = vadd.f32 %v1047, %v1060
        %v1062 = vpop.f32.mrf.mxu0
        %v1063 = vadd.f32 %v1049, %v1062
        %1064 = vdwg.mxu0
        %1065 = vmatpush.bf16.msra.mxu0 %v804
        %1066 = vmatpush.bf16.msra.mxu0 %v801
        %1067 = vmatpush.bf16.msra.mxu0 %v798
        %1068 = vmatpush.bf16.msra.mxu0 %v795
        %1069 = vmatpush.bf16.msra.mxu0 %v792
        %1070 = vmatpush.bf16.msra.mxu0 %v789
        %1071 = vmatpush.bf16.msra.mxu0 %v786
        %1072 = vmatpush.bf16.msra.mxu0 %v783
        %1073 = vmatmul.bf16.gmra.mxu0 %v407
        %v1074 = vpop.f32.mrf.mxu0
        %v1075 = vadd.f32 %v1061, %v1074
        %v1076 = vpop.f32.mrf.mxu0
        %v1077 = vadd.f32 %v1063, %v1076
        %1078 = vdwg.mxu0
        %1079 = vmatpush.bf16.msra.mxu0 %v828
        %1080 = vmatpush.bf16.msra.mxu0 %v825
        %1081 = vmatpush.bf16.msra.mxu0 %v822
        %1082 = vmatpush.bf16.msra.mxu0 %v819
        %1083 = vmatpush.bf16.msra.mxu0 %v816
        %1084 = vmatpush.bf16.msra.mxu0 %v813
        %1085 = vmatpush.bf16.msra.mxu0 %v810
        %1086 = vmatpush.bf16.msra.mxu0 %v807
        %1087 = vmatmul.bf16.gmra.mxu0 %v408
        %v1088 = vpop.f32.mrf.mxu0
        %v1089 = vadd.f32 %v1075, %v1088
        %v1090 = vpop.f32.mrf.mxu0
        %v1091 = vadd.f32 %v1077, %v1090
        %1092 = vdwg.mxu0
        %v1093 = vld [vmem:[%s2] sm:$0x7]
        %v1095 = vperm.slane %v1093, 0
        %v1096 = vperm.slane %v1093, 1
        %v1097 = vperm.slane %v1093, 2
        %v1101 = vadd.f32 %v977, %v1095
        %v1102 = vadd.f32 %v1033, %v1096
        %v1103 = vadd.f32 %v1089, %v1097
        %v1104 = vadd.f32 %v979, %v1095
        %v1105 = vadd.f32 %v1035, %v1096
        %v1106 = vadd.f32 %v1091, %v1097
        %v1107 = vpack.c.bf16 %v1102, %v1101
        %v1108 = vpack.c.bf16 %v1103, %v1103
        %v1109 = vpack.c.bf16 %v1105, %v1104
        %v1110 = vpack.c.bf16 %v1106, %v1106
        %1111 = vst [vmem:[%s205] sm:$0xff] %v1107
        %vm1112 = vcmask 257024
        %1113 = vst.msk [vmem:[%s205 + $0x8] sm:$0xf] %vm1112, %v1108
        %1114 = vst [vmem:[%s205 + $0xc] sm:$0xff] %v1109
        %1115 = vst.msk [vmem:[%s205 + $0x14] sm:$0xf] %vm1112, %v1110
        %v1116 = vadd.f32 %v977, %v979
        %v1117 = vrot.slane %v1116, 4
        %v1118 = vadd.f32 %v1116, %v1117
        %v1119 = vrot.slane %v1118, 2
        %v1120 = vadd.f32 %v1118, %v1119
        %v1121 = vrot.slane %v1120, 1
        %v1122 = vadd.f32 %v1120, %v1121
        %v1123 = vadd.f32 %v1033, %v1035
        %v1124 = vrot.slane %v1123, 4
        %v1125 = vadd.f32 %v1123, %v1124
        %v1126 = vrot.slane %v1125, 2
        %v1127 = vadd.f32 %v1125, %v1126
        %v1128 = vrot.slane %v1127, 1
        %v1129 = vadd.f32 %v1127, %v1128
        %vm1130 = vcmask 261120
        %v1131 = vsel %vm1130, %v1089, 0.0
        %v1132 = vsel %vm1130, %v1091, 0.0
        %v1133 = vadd.f32 %v1131, %v1132
        %v1134 = vrot.slane %v1133, 4
        %v1135 = vadd.f32 %v1133, %v1134
        %v1136 = vrot.slane %v1135, 2
        %v1137 = vadd.f32 %v1135, %v1136
        %v1138 = vrot.slane %v1137, 1
        %v1139 = vadd.f32 %v1137, %v1138
        %v1140 = vmul.f32 %v977, %v977
        %v1141 = vmul.f32 %v1033, %v1033
        %v1142 = vmul.f32 %v1089, %v1089
        %v1143 = vmul.f32 %v979, %v979
        %v1144 = vmul.f32 %v1035, %v1035
        %v1145 = vmul.f32 %v1091, %v1091
        %v1146 = vadd.f32 %v1140, %v1143
        %v1147 = vrot.slane %v1146, 4
        %v1148 = vadd.f32 %v1146, %v1147
        %v1149 = vrot.slane %v1148, 2
        %v1150 = vadd.f32 %v1148, %v1149
        %v1151 = vrot.slane %v1150, 1
        %v1152 = vadd.f32 %v1150, %v1151
        %v1153 = vadd.f32 %v1141, %v1144
        %v1154 = vrot.slane %v1153, 4
        %v1155 = vadd.f32 %v1153, %v1154
        %v1156 = vrot.slane %v1155, 2
        %v1157 = vadd.f32 %v1155, %v1156
        %v1158 = vrot.slane %v1157, 1
        %v1159 = vadd.f32 %v1157, %v1158
        %v1160 = vsel %vm1130, %v1142, 0.0
        %v1161 = vsel %vm1130, %v1145, 0.0
        %v1162 = vadd.f32 %v1160, %v1161
        %v1163 = vrot.slane %v1162, 4
        %v1164 = vadd.f32 %v1162, %v1163
        %v1165 = vrot.slane %v1164, 2
        %v1166 = vadd.f32 %v1164, %v1165
        %v1167 = vrot.slane %v1166, 1
        %v1168 = vadd.f32 %v1166, %v1167
        %vm1169 = vcmask 1040384
        %v1170 = vsel %vm1169, %v1122, %v1152
        %v1171 = vsel %vm1169, %v1129, %v1159
        %v1172 = vsel %vm1169, %v1139, %v1168
        %v1176 = vrot.slane %v1171, 6
        %v1177 = vrot.slane %v1172, 4
        %vm1178 = vcmask 1041408
        %v1179 = vsel %vm1178, %v1170, %v1176
        %vm1180 = vcmask 1043456
        %v1181 = vsel %vm1180, %v1179, %v1177
        %vm1183 = vcmask 1043458
        %vm1184 = vmor %vm1183, %vm1178
        %vm1185 = vcmask 259076
        %vm1186 = vmor %vm1185, %vm1184
        %1187 = vst.msk [vmem:[%s240] sm:$0x3f] %vm1186, %v1181
        %s1188 = sand.u32 %s92, 1
        %s1189 = sand.u32 %s92, 1
        %s1190 = smul.addr %s1189, 24
        %s1191 = scalar_lea.vmem [#allocation2], %s1190
        %p1192 = scmp.lt.s32.totalorder %s16, 1
        %s1193 = scalar_select %p1192, %s16, 1
        %s1194 = smul.addr %s1193, 3
        %s1195 = smul.addr %s1194, 2
        %s1196 = scalar_lea.vmem %s4, %s1195
        // Predicated region
        $region33: #{ver_hor_bn_re.2} parent=31 // pred_check
          %p1197 = pneg %p102
        $region34: #{ver_hor_bn_re.2} parent=31 // pred_check_branch
          %1199 = sbr.rel (%p1197) target = $region36
        $region35: #{ver_hor_bn_re.2} parent=31 // pred_region
          %s1200 = smul.u32 2, %s16
          %s1201 = ssub.s32 3, %s1200
          %p1202 = scmp.lt.s32.totalorder %s1201, 2
          %s1203 = scalar_select %p1202, %s1201, 2
          %s1204 = smul.u32 4, %s1203
          %s1205 = smul.u32 %s1204, 3
          %p1206 = scmp.ne.s32.totalorder 0, %s1205
          %s1207 = smul.addr %s1200, 3
          %s1208 = smul.addr %s1207, 4
          %s1209 = scalar_lea.vmem %s3, %s1208
          // Predicated region
          $region37: #{ver_hor_bn_re.2} parent=35 // pred_check
            %p1210 = pneg %p1206
          $region38: #{ver_hor_bn_re.2} parent=35 // pred_check_branch
            %1212 = sbr.rel (%p1210) target = $region40
          $region39: #{ver_hor_bn_re.2} parent=35 // pred_region
            // Predicated region
            $region41: #{ver_hor_bn_re.2} parent=39 // pred_check
              _
            $region42: #{ver_hor_bn_re.2} parent=39 // pred_check_branch
              %1214 = sbr.rel (0) target = $region44
            $region43: #{ver_hor_bn_re.2} parent=39 // pred_region
              %s1215 = scalar_lea.vmem %s1191, 8 [#allocation2]
              %s1216 = scalar_lea.vmem %s1209, 8
              %s1217 = sshrl.u32 %s1203, 1
              // While loop
              $region45: #{ver_hor_bn_re.2} parent=43 // loop_pre_header
                _
              $region46: #{ver_hor_bn_re.2} parent=43 // loop_header
                %s1219 = sphi 0, %s1221
                %p1220 = scmp.ge.s32.totalorder %s1219, %s1217
                %s1224 = sphi 0, %s1233
                %s1225 = sphi %s1191, %s1236
                %s1226 = sphi %s1209, %s1237
              $region47: #{ver_hor_bn_re.2} parent=43 // loop_header_branch
                %1223 = sbr.rel (%p1220) target = $region51
              $region48: #{ver_hor_bn_re.2} parent=43 // loop_body
                %v1227 = vld [vmem:[%s1225] sm:$0xff]
                %1228 = vst [vmem:[%s1226] sm:$0xff] %v1227
                %v1229 = vld [vmem:[%s1225 + $0xc] sm:$0xff]
                %1230 = vst [vmem:[%s1226 + $0xc] sm:$0xff] %v1229
                %s1231 = sadd.s32 1, %s1224
                %p1232 = scmp.ge.s32.totalorder %s1231, %s1217
                %s1233 = scalar_select %p1232, 0, %s1231
                %s1234 = smul.u32 %s1233, 24
                %s1235 = smul.u32 %s1233, 24
                %s1236 = scalar_lea.vmem %s1191, %s1234 [#allocation2]
                %s1237 = scalar_lea.vmem %s1209, %s1235
              $region49: #{ver_hor_bn_re.2} parent=43 // loop_footer
                %s1221 = sadd.s32 %s1219, 1
              $region50: #{ver_hor_bn_re.2} parent=43 // loop_footer_branch
                %1218 = sbr.rel target = $region46
              $region51: #{ver_hor_bn_re.2} parent=43 // loop_exit
                _
              %s1238 = sshrl.u32 %s1203, 1
              %s1239 = sand.u32 %s1203, 1
              %s1240 = smul.u32 %s1238, 2
              %s1241 = smul.u32 12, %s1240
              %s1242 = scalar_lea.vmem %s1191, %s1241 [#allocation2]
              %s1243 = smul.u32 12, %s1240
              %s1244 = scalar_lea.vmem %s1209, %s1243
              // While loop
              $region52: #{ver_hor_bn_re.2} parent=43 // loop_pre_header
                _
              $region53: #{ver_hor_bn_re.2} parent=43 // loop_header
                %s1246 = sphi 0, %s1248
                %p1247 = scmp.ge.s32.totalorder %s1246, %s1239
                %s1251 = sphi 0, %s1258
                %s1252 = sphi %s1242, %s1261
                %s1253 = sphi %s1244, %s1262
              $region54: #{ver_hor_bn_re.2} parent=43 // loop_header_branch
                %1250 = sbr.rel (%p1247) target = $region58
              $region55: #{ver_hor_bn_re.2} parent=43 // loop_body
                %v1254 = vld [vmem:[%s1252] sm:$0xff]
                %1255 = vst [vmem:[%s1253] sm:$0xff] %v1254
                %s1256 = sadd.s32 1, %s1251
                %p1257 = scmp.ge.s32.totalorder %s1256, %s1239
                %s1258 = scalar_select %p1257, 0, %s1256
                %s1259 = smul.u32 %s1258, 12
                %s1260 = smul.u32 %s1258, 12
                %s1261 = scalar_lea.vmem %s1242, %s1259 [#allocation2]
                %s1262 = scalar_lea.vmem %s1244, %s1260
              $region56: #{ver_hor_bn_re.2} parent=43 // loop_footer
                %s1248 = sadd.s32 %s1246, 1
              $region57: #{ver_hor_bn_re.2} parent=43 // loop_footer_branch
                %1245 = sbr.rel target = $region53
              $region58: #{ver_hor_bn_re.2} parent=43 // loop_exit
                _
              %s1264 = ssub.s32 16, 1
              %s1265 = sshrl.u32 %s1203, 1
              // While loop
              $region59: #{ver_hor_bn_re.2} parent=43 // loop_pre_header
                _
              $region60: #{ver_hor_bn_re.2} parent=43 // loop_header
                %s1267 = sphi 0, %s1269
                %p1268 = scmp.ge.s32.totalorder %s1267, %s1265
                %s1272 = sphi 0, %s1281
                %s1273 = sphi %s1215, %s1284
                %s1274 = sphi %s1216, %s1285
              $region61: #{ver_hor_bn_re.2} parent=43 // loop_header_branch
                %1271 = sbr.rel (%p1268) target = $region65
              $region62: #{ver_hor_bn_re.2} parent=43 // loop_body
                %v1275 = vld [vmem:[%s1273] sm:%s1264]
                %1276 = vst [vmem:[%s1274] sm:%s1264] %v1275
                %v1277 = vld [vmem:[%s1273 + $0xc] sm:%s1264]
                %1278 = vst [vmem:[%s1274 + $0xc] sm:%s1264] %v1277
                %s1279 = sadd.s32 1, %s1272
                %p1280 = scmp.ge.s32.totalorder %s1279, %s1265
                %s1281 = scalar_select %p1280, 0, %s1279
                %s1282 = smul.u32 %s1281, 24
                %s1283 = smul.u32 %s1281, 24
                %s1284 = scalar_lea.vmem %s1215, %s1282 [#allocation2]
                %s1285 = scalar_lea.vmem %s1216, %s1283
              $region63: #{ver_hor_bn_re.2} parent=43 // loop_footer
                %s1269 = sadd.s32 %s1267, 1
              $region64: #{ver_hor_bn_re.2} parent=43 // loop_footer_branch
                %1266 = sbr.rel target = $region60
              $region65: #{ver_hor_bn_re.2} parent=43 // loop_exit
                _
              %s1286 = sshrl.u32 %s1203, 1
              %s1287 = sand.u32 %s1203, 1
              %s1288 = smul.u32 %s1286, 2
              %s1289 = smul.u32 12, %s1288
              %s1290 = scalar_lea.vmem %s1215, %s1289 [#allocation2]
              %s1291 = smul.u32 12, %s1288
              %s1292 = scalar_lea.vmem %s1216, %s1291
              // While loop
              $region66: #{ver_hor_bn_re.2} parent=43 // loop_pre_header
                _
              $region67: #{ver_hor_bn_re.2} parent=43 // loop_header
                %s1294 = sphi 0, %s1296
                %p1295 = scmp.ge.s32.totalorder %s1294, %s1287
                %s1299 = sphi 0, %s1306
                %s1300 = sphi %s1290, %s1309
                %s1301 = sphi %s1292, %s1310
              $region68: #{ver_hor_bn_re.2} parent=43 // loop_header_branch
                %1298 = sbr.rel (%p1295) target = $region72
              $region69: #{ver_hor_bn_re.2} parent=43 // loop_body
                %v1302 = vld [vmem:[%s1300] sm:%s1264]
                %1303 = vst [vmem:[%s1301] sm:%s1264] %v1302
                %s1304 = sadd.s32 1, %s1299
                %p1305 = scmp.ge.s32.totalorder %s1304, %s1287
                %s1306 = scalar_select %p1305, 0, %s1304
                %s1307 = smul.u32 %s1306, 12
                %s1308 = smul.u32 %s1306, 12
                %s1309 = scalar_lea.vmem %s1290, %s1307 [#allocation2]
                %s1310 = scalar_lea.vmem %s1292, %s1308
              $region70: #{ver_hor_bn_re.2} parent=43 // loop_footer
                %s1296 = sadd.s32 %s1294, 1
              $region71: #{ver_hor_bn_re.2} parent=43 // loop_footer_branch
                %1293 = sbr.rel target = $region67
              $region72: #{ver_hor_bn_re.2} parent=43 // loop_exit
                _
            $region44: #{ver_hor_bn_re.2} parent=39 // pred_fallthru
              _
          $region40: #{ver_hor_bn_re.2} parent=35 // pred_fallthru
            _
          %1311 = vnop
        $region36: #{ver_hor_bn_re.2} parent=31 // pred_fallthru
          _
        // Predicated region
        $region73: #{ver_hor_bn_re.2} parent=31 // pred_check
          %p1312 = pneg %p128
        $region74: #{ver_hor_bn_re.2} parent=31 // pred_check_branch
          %1314 = sbr.rel (%p1312) target = $region76
        $region75: #{ver_hor_bn_re.2} parent=31 // pred_region
          _
        $region76: #{ver_hor_bn_re.2} parent=31 // pred_fallthru
          _
      $region32: #{ver_hor_bn_re.2} parent=5 // pred_fallthru
        _
      %p1315 = scmp.le.s32.totalorder 2, %s11
      // Predicated region
      $region77: #{ver_hor_bn_re.2} parent=5 // pred_check
        %p1316 = pneg %p1315
      $region78: #{ver_hor_bn_re.2} parent=5 // pred_check_branch
        %1318 = sbr.rel (%p1316) target = $region80
      $region79: #{ver_hor_bn_re.2} parent=5 // pred_region
        %s1319 = ssub.s32 %s11, 2
        // Predicated region
        $region81: #{ver_hor_bn_re.2} parent=79 // pred_check
          %p1320 = pneg %p108
        $region82: #{ver_hor_bn_re.2} parent=79 // pred_check_branch
          %1322 = sbr.rel (%p1320) target = $region84
        $region83: #{ver_hor_bn_re.2} parent=79 // pred_region
          %s1323 = sand.u32 %s93, 1
          %s1324 = sand.u32 %s93, 1
          %s1325 = smul.addr %s1324, 24
          %s1326 = scalar_lea.vmem [#allocation2], %s1325
        $region84: #{ver_hor_bn_re.2} parent=79 // pred_fallthru
          _
        // Predicated region
        $region85: #{ver_hor_bn_re.2} parent=79 // pred_check
          %p1327 = pneg %p134
        $region86: #{ver_hor_bn_re.2} parent=79 // pred_check_branch
          %1329 = sbr.rel (%p1327) target = $region88
        $region87: #{ver_hor_bn_re.2} parent=79 // pred_region
          %p1330 = scmp.lt.s32.totalorder %s17, 1
          %s1331 = scalar_select %p1330, %s17, 1
          %s1332 = smul.addr %s1331, 3
          %s1333 = smul.addr %s1332, 2
          %s1334 = scalar_lea.vmem %s4, %s1333
        $region88: #{ver_hor_bn_re.2} parent=79 // pred_fallthru
          _
      $region80: #{ver_hor_bn_re.2} parent=5 // pred_fallthru
        _
    $region6: #{ver_hor_bn_re.2} parent=1 // loop_footer
      %s15 = sadd.s32 1, %s11
    $region7: #{ver_hor_bn_re.2} parent=1 // loop_footer_branch
      %10 = sbr.rel target = $region3
    $region8: #{ver_hor_bn_re.2} parent=1 // loop_exit
      _

</llo_original>
